<compile_context>
chip_gen: v5e
topology: v5e:2x2
jax: 0.10.0
libtpu: 0.0.40
codegen_flags: <defaults>
</compile_context>

<pallas_src>
from collections import OrderedDict

import jax
import jax.numpy as jnp
import numpy as np
from jax.experimental import pallas as pl
from jax.experimental.pallas import tpu as pltpu

_NEG_LOG_CLAMP = -100.0  # PyTorch binary_cross_entropy clamps log at -100

_LANES = 512              # lane axis (multiple of 128) for all flattened maps
_MAX_ROWS_PER_TILE = 256  # ~9 MB of double-buffered VMEM at L=512 -> fits the
                          # default scoped VMEM on v5e/v6e/v7x
_NUM_CORES = 2            # row-block split across TensorCores (v7x); harmless
                          # (just a serial outer loop) on 1-TC chips


def _round_up(x, m):
    return ((x + m - 1) // m) * m


def _u2net_loss_kernel(d0_ref, d1_ref, d2_ref, d3_ref, d4_ref, d5_ref, d6_ref,
                       lab_ref, dist_ref, out_ref):
    """Accumulate 22 partial-sum slabs of shape (8, LANES) into out_ref.

    out_ref rows:
      0..6  : sum(bce_elem * pos_mask)   for d0..d6
      7..13 : sum(bce_elem)              for d0..d6   (neg part = total - pos)
      14..20: sum(pred * dist_map)       for d0..d6
      21    : sum(pos_mask)              (label == 1 count)
    """
    @pl.when(pl.program_id(1) == 0)
    def _init():
        out_ref[...] = jnp.zeros_like(out_ref)

    lab = lab_ref[...].astype(jnp.float32)    # (TR, L), values in {0, 1}
    dist = dist_ref[...].astype(jnp.float32)  # (TR, L)
    is_pos = lab > 0.5

    tr, lanes = lab.shape
    groups = tr // 8

    def fold(x):
        # (TR, L) -> (8, L): group-of-8 inter-vreg VPU adds, no XLU reduce.
        return jnp.sum(x.reshape(groups, 8, lanes), axis=0)

    pos_bce, tot_bce, boundary = [], [], []
    for d_ref in (d0_ref, d1_ref, d2_ref, d3_ref, d4_ref, d5_ref, d6_ref):
        p = d_ref[...].astype(jnp.float32)
        # Single log per element; exact for hard 0/1 labels (padded elements
        # have p == 0, lab == 0 -> q == 1 -> bce == 0, so padding is inert).
        q = jnp.where(is_pos, p, 1.0 - p)
        bce = -jnp.maximum(jnp.log(q), _NEG_LOG_CLAMP)
        pos_bce.append(fold(bce * lab))
        tot_bce.append(fold(bce))
        boundary.append(fold(p * dist))

    block = jnp.stack(pos_bce + tot_bce + boundary + [fold(lab)], axis=0)
    out_ref[...] += block  # single full-tile read-modify-write per grid step


def _flatten_pad(x, dtype, n_pad_elems):
    """Flatten to 1-D, zero-pad to n_pad_elems, view as (rows, LANES)."""
    flat = jnp.asarray(x, dtype).reshape(-1)
    pad = n_pad_elems - flat.shape[0]
    if pad:
        flat = jnp.pad(flat, (0, pad))
    return flat.reshape(-1, _LANES)


def _run_loss_kernel(d_list, label, dist_map):
    """Returns the (22,) vector of global partial sums."""
    n_true = int(np.prod(label.shape))
    rows = -(-n_true // _LANES)  # cdiv
    # Row tile: multiple of 16 (bf16 sublane packing), capped for VMEM.
    tr = min(_MAX_ROWS_PER_TILE, _round_up(rows, 16))
    rows_pad = _round_up(rows, _NUM_CORES * tr)
    n_pad_elems = rows_pad * _LANES
    n_blocks_per_core = rows_pad // tr // _NUM_CORES

    d2 = [_flatten_pad(d, jnp.float32, n_pad_elems) for d in d_list]
    lab2 = _flatten_pad(label, jnp.bfloat16, n_pad_elems)
    dist2 = _flatten_pad(dist_map, jnp.bfloat16, n_pad_elems)

    def row_map(c, i):
        return (c * n_blocks_per_core + i, 0)

    in_specs = [pl.BlockSpec((tr, _LANES), row_map) for _ in range(9)]
    out_spec = pl.BlockSpec((22, 8, _LANES), lambda c, i: (c, 0, 0))

    partials = pl.pallas_call(
        _u2net_loss_kernel,
        out_shape=jax.ShapeDtypeStruct((_NUM_CORES * 22, 8, _LANES),
                                       jnp.float32),
        grid_spec=pltpu.PrefetchScalarGridSpec(
            num_scalar_prefetch=0,
            grid=(_NUM_CORES, n_blocks_per_core),
            in_specs=in_specs,
            out_specs=out_spec,
        ),
        compiler_params=pltpu.CompilerParams(
            dimension_semantics=("parallel", "arbitrary")),
    )(*d2, lab2, dist2)

    # Tiny glue: fold the per-core slabs and the (8, L) lane/sublane partials.
    return partials.reshape(_NUM_CORES, 22, -1).sum(axis=(0, 2))  # (22,)


def u2net_loss_v2(pred, batch, alpha=1.0, **kwargs):
    """JAX/Pallas equivalent of U2NetLossV2.forward."""
    alpha = kwargs.get("alpha", alpha)
    d_list = [pred[f"d{i}"] for i in range(7)]
    label = batch["label"]
    dist_map = batch["dist_map"]
    n = float(np.prod(label.shape))

    sums = _run_loss_kernel(d_list, label, dist_map)  # (22,)
    pos_bce = sums[0:7]
    neg_bce = sums[7:14] - pos_bce
    bnd_sum = sums[14:21]
    pos_cnt = sums[21]
    neg_cnt = n - pos_cnt

    # mean(weight * bce), weight = pos*(neg_cnt/N) + neg*(pos_cnt/N)
    bce_terms = (pos_bce * (neg_cnt / n) + neg_bce * (pos_cnt / n)) / n  # (7,)
    boundary_terms = bnd_sum / n                                          # (7,)

    bce_loss = jnp.sum(bce_terms)
    boundary_loss = jnp.sum(boundary_terms)
    total_loss = alpha * bce_loss + (1.0 - alpha) * boundary_loss

    metrics = OrderedDict()
    for d in range(7):
        metrics[f"d{d}_bce"] = bce_terms[d]
    metrics["bce_loss"] = bce_loss
    for d in range(7):
        metrics[f"d{d}_boundary"] = boundary_terms[d]
    metrics["boundary_loss"] = boundary_loss
    metrics["total_loss"] = total_loss
    metrics["alpha"] = alpha
    return total_loss, metrics


def _reference(pred, batch, alpha=1.0):
    """Pure-JAX reference (two-log form, soft-label capable).

    dist_map is rounded to bf16 to mirror the kernel's bandwidth-saving read;
    the label path is exact (binary labels are exactly representable).
    """
    label = jnp.asarray(batch["label"], jnp.float32)
    dist = jnp.asarray(batch["dist_map"], jnp.bfloat16).astype(jnp.float32)
    pos = label
    neg = 1.0 - label
    n = float(label.size)
    pos_cnt = jnp.sum(pos)
    neg_cnt = jnp.sum(neg)

    bce_loss = 0.0
    boundary_loss = 0.0
    for d in range(7):
        p = jnp.asarray(pred[f"d{d}"], jnp.float32)
        logp = jnp.maximum(jnp.log(p), _NEG_LOG_CLAMP)
        log1mp = jnp.maximum(jnp.log(1.0 - p), _NEG_LOG_CLAMP)
        bce = -(pos * logp + neg * log1mp)
        weight = pos * (neg_cnt / n) + neg * (pos_cnt / n)
        bce_loss = bce_loss + jnp.sum(weight * bce) / n
        boundary_loss = boundary_loss + jnp.mean(p * dist)
    return alpha * bce_loss + (1.0 - alpha) * boundary_loss


if __name__ == "__main__":
    key = jax.random.PRNGKey(0)
    B, C, H, W = 2, 1, 16, 16

    keys = jax.random.split(key, 9)
    pred = {
        f"d{i}": jax.nn.sigmoid(
            jax.random.normal(keys[i], (B, C, H, W), jnp.float32))
        for i in range(7)
    }
    label = (jax.random.uniform(keys[7], (B, C, H, W)) < 0.4).astype(
        jnp.float32)
    dist_map = jax.random.normal(keys[8], (B, C, H, W), jnp.float32)
    batch = {"label": label, "dist_map": dist_map}

    for alpha in (1.0, 0.5):
        total_loss, metrics = u2net_loss_v2(pred, batch, alpha=alpha)
        total_loss = jax.block_until_ready(total_loss)
        ref = jax.block_until_ready(_reference(pred, batch, alpha=alpha))
        np.testing.assert_allclose(np.asarray(total_loss), np.asarray(ref),
                                   rtol=1e-5, atol=1e-6)

    print("KERNEL_OK")
</pallas_src>

<mosaic_0001>
module attributes {stable_mosaic.version = 11 : i64} {
  func.func @_u2net_loss_kernel(%arg0: i32, %arg1: i32, %arg2: memref<16x512xf32, #tpu.memory_space<vmem>>, %arg3: memref<16x512xf32, #tpu.memory_space<vmem>>, %arg4: memref<16x512xf32, #tpu.memory_space<vmem>>, %arg5: memref<16x512xf32, #tpu.memory_space<vmem>>, %arg6: memref<16x512xf32, #tpu.memory_space<vmem>>, %arg7: memref<16x512xf32, #tpu.memory_space<vmem>>, %arg8: memref<16x512xf32, #tpu.memory_space<vmem>>, %arg9: memref<16x512xbf16, #tpu.memory_space<vmem>>, %arg10: memref<16x512xbf16, #tpu.memory_space<vmem>>, %arg11: memref<22x8x512xf32, #tpu.memory_space<vmem>>) attributes {dimension_semantics = [#tpu.dimension_semantics<parallel>, #tpu.dimension_semantics<arbitrary>], iteration_bounds = array<i64: 2, 1>, scalar_prefetch = 0 : i64, scratch_operands = 0 : i64, tpu.core_type = #tpu.core_type<tc>, window_params = [{transform_indices = @transform_0, window_bounds = array<i64: 16, 512>}, {transform_indices = @transform_1, window_bounds = array<i64: 16, 512>}, {transform_indices = @transform_2, window_bounds = array<i64: 16, 512>}, {transform_indices = @transform_3, window_bounds = array<i64: 16, 512>}, {transform_indices = @transform_4, window_bounds = array<i64: 16, 512>}, {transform_indices = @transform_5, window_bounds = array<i64: 16, 512>}, {transform_indices = @transform_6, window_bounds = array<i64: 16, 512>}, {transform_indices = @transform_7, window_bounds = array<i64: 16, 512>}, {transform_indices = @transform_8, window_bounds = array<i64: 16, 512>}, {transform_indices = @transform_9, window_bounds = array<i64: 22, 8, 512>}]} {
    %c0_i32 = arith.constant 0 : i32
    %0 = arith.cmpi eq, %arg1, %c0_i32 : i32
    %1 = arith.extui %0 : i1 to i32
    %c0_i32_0 = arith.constant 0 : i32
    %2 = arith.cmpi ne, %1, %c0_i32_0 : i32
    scf.if %2 {
      %cst_67 = arith.constant 0.000000e+00 : f32
      %158 = vector.broadcast %cst_67 : f32 to vector<22x8x512xf32>
      %c0_68 = arith.constant 0 : index
      %c0_69 = arith.constant 0 : index
      %c0_70 = arith.constant 0 : index
      %159 = vector.load %arg11[%c0_68, %c0_69, %c0_70] : memref<22x8x512xf32, #tpu.memory_space<vmem>>, vector<22x8x512xf32>
      tpu.vector_store %arg11[%c0_68, %c0_69, %c0_70], %158 {strides = array<i32>} : memref<22x8x512xf32, #tpu.memory_space<vmem>>, vector<22x8x512xf32>,
    } else {
    }
    %c0 = arith.constant 0 : index
    %c0_1 = arith.constant 0 : index
    %3 = vector.load %arg9[%c0, %c0_1] : memref<16x512xbf16, #tpu.memory_space<vmem>>, vector<16x512xbf16>
    %4 = arith.extf %3 : vector<16x512xbf16> to vector<16x512xf32>
    %c0_2 = arith.constant 0 : index
    %c0_3 = arith.constant 0 : index
    %5 = vector.load %arg10[%c0_2, %c0_3] : memref<16x512xbf16, #tpu.memory_space<vmem>>, vector<16x512xbf16>
    %6 = arith.extf %5 : vector<16x512xbf16> to vector<16x512xf32>
    %cst = arith.constant 5.000000e-01 : f32
    %7 = vector.broadcast %cst : f32 to vector<16x512xf32>
    %8 = arith.cmpf ogt, %4, %7 : vector<16x512xf32>
    %c0_4 = arith.constant 0 : index
    %c0_5 = arith.constant 0 : index
    %9 = vector.load %arg2[%c0_4, %c0_5] : memref<16x512xf32, #tpu.memory_space<vmem>>, vector<16x512xf32>
    %cst_6 = arith.constant 1.000000e+00 : f32
    %10 = vector.broadcast %cst_6 : f32 to vector<16x512xf32>
    %11 = arith.subf %10, %9 : vector<16x512xf32>
    %12 = arith.select %8, %9, %11 : vector<16x512xi1>, vector<16x512xf32>
    %13 = math.log %12 : vector<16x512xf32>
    %cst_7 = arith.constant -1.000000e+02 : f32
    %14 = vector.broadcast %cst_7 : f32 to vector<16x512xf32>
    %15 = arith.maximumf %13, %14 : vector<16x512xf32>
    %cst_8 = arith.constant 0.000000e+00 : f32
    %16 = vector.broadcast %cst_8 : f32 to vector<16x512xf32>
    %17 = arith.subf %16, %15 : vector<16x512xf32>
    %18 = arith.mulf %17, %4 : vector<16x512xf32>
    %19 = vector.shape_cast %18 : vector<16x512xf32> to vector<2x8x512xf32>
    %cst_9 = arith.constant dense<0.000000e+00> : vector<8x512xf32>
    %20 = vector.multi_reduction <add>, %19, %cst_9 [0] : vector<2x8x512xf32> to vector<8x512xf32>
    %21 = vector.shape_cast %17 : vector<16x512xf32> to vector<2x8x512xf32>
    %cst_10 = arith.constant dense<0.000000e+00> : vector<8x512xf32>
    %22 = vector.multi_reduction <add>, %21, %cst_10 [0] : vector<2x8x512xf32> to vector<8x512xf32>
    %23 = arith.mulf %9, %6 : vector<16x512xf32>
    %24 = vector.shape_cast %23 : vector<16x512xf32> to vector<2x8x512xf32>
    %cst_11 = arith.constant dense<0.000000e+00> : vector<8x512xf32>
    %25 = vector.multi_reduction <add>, %24, %cst_11 [0] : vector<2x8x512xf32> to vector<8x512xf32>
    %c0_12 = arith.constant 0 : index
    %c0_13 = arith.constant 0 : index
    %26 = vector.load %arg3[%c0_12, %c0_13] : memref<16x512xf32, #tpu.memory_space<vmem>>, vector<16x512xf32>
    %cst_14 = arith.constant 1.000000e+00 : f32
    %27 = vector.broadcast %cst_14 : f32 to vector<16x512xf32>
    %28 = arith.subf %27, %26 : vector<16x512xf32>
    %29 = arith.select %8, %26, %28 : vector<16x512xi1>, vector<16x512xf32>
    %30 = math.log %29 : vector<16x512xf32>
    %cst_15 = arith.constant -1.000000e+02 : f32
    %31 = vector.broadcast %cst_15 : f32 to vector<16x512xf32>
    %32 = arith.maximumf %30, %31 : vector<16x512xf32>
    %cst_16 = arith.constant 0.000000e+00 : f32
    %33 = vector.broadcast %cst_16 : f32 to vector<16x512xf32>
    %34 = arith.subf %33, %32 : vector<16x512xf32>
    %35 = arith.mulf %34, %4 : vector<16x512xf32>
    %36 = vector.shape_cast %35 : vector<16x512xf32> to vector<2x8x512xf32>
    %cst_17 = arith.constant dense<0.000000e+00> : vector<8x512xf32>
    %37 = vector.multi_reduction <add>, %36, %cst_17 [0] : vector<2x8x512xf32> to vector<8x512xf32>
    %38 = vector.shape_cast %34 : vector<16x512xf32> to vector<2x8x512xf32>
    %cst_18 = arith.constant dense<0.000000e+00> : vector<8x512xf32>
    %39 = vector.multi_reduction <add>, %38, %cst_18 [0] : vector<2x8x512xf32> to vector<8x512xf32>
    %40 = arith.mulf %26, %6 : vector<16x512xf32>
    %41 = vector.shape_cast %40 : vector<16x512xf32> to vector<2x8x512xf32>
    %cst_19 = arith.constant dense<0.000000e+00> : vector<8x512xf32>
    %42 = vector.multi_reduction <add>, %41, %cst_19 [0] : vector<2x8x512xf32> to vector<8x512xf32>
    %c0_20 = arith.constant 0 : index
    %c0_21 = arith.constant 0 : index
    %43 = vector.load %arg4[%c0_20, %c0_21] : memref<16x512xf32, #tpu.memory_space<vmem>>, vector<16x512xf32>
    %cst_22 = arith.constant 1.000000e+00 : f32
    %44 = vector.broadcast %cst_22 : f32 to vector<16x512xf32>
    %45 = arith.subf %44, %43 : vector<16x512xf32>
    %46 = arith.select %8, %43, %45 : vector<16x512xi1>, vector<16x512xf32>
    %47 = math.log %46 : vector<16x512xf32>
    %cst_23 = arith.constant -1.000000e+02 : f32
    %48 = vector.broadcast %cst_23 : f32 to vector<16x512xf32>
    %49 = arith.maximumf %47, %48 : vector<16x512xf32>
    %cst_24 = arith.constant 0.000000e+00 : f32
    %50 = vector.broadcast %cst_24 : f32 to vector<16x512xf32>
    %51 = arith.subf %50, %49 : vector<16x512xf32>
    %52 = arith.mulf %51, %4 : vector<16x512xf32>
    %53 = vector.shape_cast %52 : vector<16x512xf32> to vector<2x8x512xf32>
    %cst_25 = arith.constant dense<0.000000e+00> : vector<8x512xf32>
    %54 = vector.multi_reduction <add>, %53, %cst_25 [0] : vector<2x8x512xf32> to vector<8x512xf32>
    %55 = vector.shape_cast %51 : vector<16x512xf32> to vector<2x8x512xf32>
    %cst_26 = arith.constant dense<0.000000e+00> : vector<8x512xf32>
    %56 = vector.multi_reduction <add>, %55, %cst_26 [0] : vector<2x8x512xf32> to vector<8x512xf32>
    %57 = arith.mulf %43, %6 : vector<16x512xf32>
    %58 = vector.shape_cast %57 : vector<16x512xf32> to vector<2x8x512xf32>
    %cst_27 = arith.constant dense<0.000000e+00> : vector<8x512xf32>
    %59 = vector.multi_reduction <add>, %58, %cst_27 [0] : vector<2x8x512xf32> to vector<8x512xf32>
    %c0_28 = arith.constant 0 : index
    %c0_29 = arith.constant 0 : index
    %60 = vector.load %arg5[%c0_28, %c0_29] : memref<16x512xf32, #tpu.memory_space<vmem>>, vector<16x512xf32>
    %cst_30 = arith.constant 1.000000e+00 : f32
    %61 = vector.broadcast %cst_30 : f32 to vector<16x512xf32>
    %62 = arith.subf %61, %60 : vector<16x512xf32>
    %63 = arith.select %8, %60, %62 : vector<16x512xi1>, vector<16x512xf32>
    %64 = math.log %63 : vector<16x512xf32>
    %cst_31 = arith.constant -1.000000e+02 : f32
    %65 = vector.broadcast %cst_31 : f32 to vector<16x512xf32>
    %66 = arith.maximumf %64, %65 : vector<16x512xf32>
    %cst_32 = arith.constant 0.000000e+00 : f32
    %67 = vector.broadcast %cst_32 : f32 to vector<16x512xf32>
    %68 = arith.subf %67, %66 : vector<16x512xf32>
    %69 = arith.mulf %68, %4 : vector<16x512xf32>
    %70 = vector.shape_cast %69 : vector<16x512xf32> to vector<2x8x512xf32>
    %cst_33 = arith.constant dense<0.000000e+00> : vector<8x512xf32>
    %71 = vector.multi_reduction <add>, %70, %cst_33 [0] : vector<2x8x512xf32> to vector<8x512xf32>
    %72 = vector.shape_cast %68 : vector<16x512xf32> to vector<2x8x512xf32>
    %cst_34 = arith.constant dense<0.000000e+00> : vector<8x512xf32>
    %73 = vector.multi_reduction <add>, %72, %cst_34 [0] : vector<2x8x512xf32> to vector<8x512xf32>
    %74 = arith.mulf %60, %6 : vector<16x512xf32>
    %75 = vector.shape_cast %74 : vector<16x512xf32> to vector<2x8x512xf32>
    %cst_35 = arith.constant dense<0.000000e+00> : vector<8x512xf32>
    %76 = vector.multi_reduction <add>, %75, %cst_35 [0] : vector<2x8x512xf32> to vector<8x512xf32>
    %c0_36 = arith.constant 0 : index
    %c0_37 = arith.constant 0 : index
    %77 = vector.load %arg6[%c0_36, %c0_37] : memref<16x512xf32, #tpu.memory_space<vmem>>, vector<16x512xf32>
    %cst_38 = arith.constant 1.000000e+00 : f32
    %78 = vector.broadcast %cst_38 : f32 to vector<16x512xf32>
    %79 = arith.subf %78, %77 : vector<16x512xf32>
    %80 = arith.select %8, %77, %79 : vector<16x512xi1>, vector<16x512xf32>
    %81 = math.log %80 : vector<16x512xf32>
    %cst_39 = arith.constant -1.000000e+02 : f32
    %82 = vector.broadcast %cst_39 : f32 to vector<16x512xf32>
    %83 = arith.maximumf %81, %82 : vector<16x512xf32>
    %cst_40 = arith.constant 0.000000e+00 : f32
    %84 = vector.broadcast %cst_40 : f32 to vector<16x512xf32>
    %85 = arith.subf %84, %83 : vector<16x512xf32>
    %86 = arith.mulf %85, %4 : vector<16x512xf32>
    %87 = vector.shape_cast %86 : vector<16x512xf32> to vector<2x8x512xf32>
    %cst_41 = arith.constant dense<0.000000e+00> : vector<8x512xf32>
    %88 = vector.multi_reduction <add>, %87, %cst_41 [0] : vector<2x8x512xf32> to vector<8x512xf32>
    %89 = vector.shape_cast %85 : vector<16x512xf32> to vector<2x8x512xf32>
    %cst_42 = arith.constant dense<0.000000e+00> : vector<8x512xf32>
    %90 = vector.multi_reduction <add>, %89, %cst_42 [0] : vector<2x8x512xf32> to vector<8x512xf32>
    %91 = arith.mulf %77, %6 : vector<16x512xf32>
    %92 = vector.shape_cast %91 : vector<16x512xf32> to vector<2x8x512xf32>
    %cst_43 = arith.constant dense<0.000000e+00> : vector<8x512xf32>
    %93 = vector.multi_reduction <add>, %92, %cst_43 [0] : vector<2x8x512xf32> to vector<8x512xf32>
    %c0_44 = arith.constant 0 : index
    %c0_45 = arith.constant 0 : index
    %94 = vector.load %arg7[%c0_44, %c0_45] : memref<16x512xf32, #tpu.memory_space<vmem>>, vector<16x512xf32>
    %cst_46 = arith.constant 1.000000e+00 : f32
    %95 = vector.broadcast %cst_46 : f32 to vector<16x512xf32>
    %96 = arith.subf %95, %94 : vector<16x512xf32>
    %97 = arith.select %8, %94, %96 : vector<16x512xi1>, vector<16x512xf32>
    %98 = math.log %97 : vector<16x512xf32>
    %cst_47 = arith.constant -1.000000e+02 : f32
    %99 = vector.broadcast %cst_47 : f32 to vector<16x512xf32>
    %100 = arith.maximumf %98, %99 : vector<16x512xf32>
    %cst_48 = arith.constant 0.000000e+00 : f32
    %101 = vector.broadcast %cst_48 : f32 to vector<16x512xf32>
    %102 = arith.subf %101, %100 : vector<16x512xf32>
    %103 = arith.mulf %102, %4 : vector<16x512xf32>
    %104 = vector.shape_cast %103 : vector<16x512xf32> to vector<2x8x512xf32>
    %cst_49 = arith.constant dense<0.000000e+00> : vector<8x512xf32>
    %105 = vector.multi_reduction <add>, %104, %cst_49 [0] : vector<2x8x512xf32> to vector<8x512xf32>
    %106 = vector.shape_cast %102 : vector<16x512xf32> to vector<2x8x512xf32>
    %cst_50 = arith.constant dense<0.000000e+00> : vector<8x512xf32>
    %107 = vector.multi_reduction <add>, %106, %cst_50 [0] : vector<2x8x512xf32> to vector<8x512xf32>
    %108 = arith.mulf %94, %6 : vector<16x512xf32>
    %109 = vector.shape_cast %108 : vector<16x512xf32> to vector<2x8x512xf32>
    %cst_51 = arith.constant dense<0.000000e+00> : vector<8x512xf32>
    %110 = vector.multi_reduction <add>, %109, %cst_51 [0] : vector<2x8x512xf32> to vector<8x512xf32>
    %c0_52 = arith.constant 0 : index
    %c0_53 = arith.constant 0 : index
    %111 = vector.load %arg8[%c0_52, %c0_53] : memref<16x512xf32, #tpu.memory_space<vmem>>, vector<16x512xf32>
    %cst_54 = arith.constant 1.000000e+00 : f32
    %112 = vector.broadcast %cst_54 : f32 to vector<16x512xf32>
    %113 = arith.subf %112, %111 : vector<16x512xf32>
    %114 = arith.select %8, %111, %113 : vector<16x512xi1>, vector<16x512xf32>
    %115 = math.log %114 : vector<16x512xf32>
    %cst_55 = arith.constant -1.000000e+02 : f32
    %116 = vector.broadcast %cst_55 : f32 to vector<16x512xf32>
    %117 = arith.maximumf %115, %116 : vector<16x512xf32>
    %cst_56 = arith.constant 0.000000e+00 : f32
    %118 = vector.broadcast %cst_56 : f32 to vector<16x512xf32>
    %119 = arith.subf %118, %117 : vector<16x512xf32>
    %120 = arith.mulf %119, %4 : vector<16x512xf32>
    %121 = vector.shape_cast %120 : vector<16x512xf32> to vector<2x8x512xf32>
    %cst_57 = arith.constant dense<0.000000e+00> : vector<8x512xf32>
    %122 = vector.multi_reduction <add>, %121, %cst_57 [0] : vector<2x8x512xf32> to vector<8x512xf32>
    %123 = vector.shape_cast %119 : vector<16x512xf32> to vector<2x8x512xf32>
    %cst_58 = arith.constant dense<0.000000e+00> : vector<8x512xf32>
    %124 = vector.multi_reduction <add>, %123, %cst_58 [0] : vector<2x8x512xf32> to vector<8x512xf32>
    %125 = arith.mulf %111, %6 : vector<16x512xf32>
    %126 = vector.shape_cast %125 : vector<16x512xf32> to vector<2x8x512xf32>
    %cst_59 = arith.constant dense<0.000000e+00> : vector<8x512xf32>
    %127 = vector.multi_reduction <add>, %126, %cst_59 [0] : vector<2x8x512xf32> to vector<8x512xf32>
    %128 = vector.shape_cast %4 : vector<16x512xf32> to vector<2x8x512xf32>
    %cst_60 = arith.constant dense<0.000000e+00> : vector<8x512xf32>
    %129 = vector.multi_reduction <add>, %128, %cst_60 [0] : vector<2x8x512xf32> to vector<8x512xf32>
    %130 = vector.shape_cast %20 : vector<8x512xf32> to vector<1x8x512xf32>
    %131 = vector.shape_cast %37 : vector<8x512xf32> to vector<1x8x512xf32>
    %132 = vector.shape_cast %54 : vector<8x512xf32> to vector<1x8x512xf32>
    %133 = vector.shape_cast %71 : vector<8x512xf32> to vector<1x8x512xf32>
    %134 = vector.shape_cast %88 : vector<8x512xf32> to vector<1x8x512xf32>
    %135 = vector.shape_cast %105 : vector<8x512xf32> to vector<1x8x512xf32>
    %136 = vector.shape_cast %122 : vector<8x512xf32> to vector<1x8x512xf32>
    %137 = vector.shape_cast %22 : vector<8x512xf32> to vector<1x8x512xf32>
    %138 = vector.shape_cast %39 : vector<8x512xf32> to vector<1x8x512xf32>
    %139 = vector.shape_cast %56 : vector<8x512xf32> to vector<1x8x512xf32>
    %140 = vector.shape_cast %73 : vector<8x512xf32> to vector<1x8x512xf32>
    %141 = vector.shape_cast %90 : vector<8x512xf32> to vector<1x8x512xf32>
    %142 = vector.shape_cast %107 : vector<8x512xf32> to vector<1x8x512xf32>
    %143 = vector.shape_cast %124 : vector<8x512xf32> to vector<1x8x512xf32>
    %144 = vector.shape_cast %25 : vector<8x512xf32> to vector<1x8x512xf32>
    %145 = vector.shape_cast %42 : vector<8x512xf32> to vector<1x8x512xf32>
    %146 = vector.shape_cast %59 : vector<8x512xf32> to vector<1x8x512xf32>
    %147 = vector.shape_cast %76 : vector<8x512xf32> to vector<1x8x512xf32>
    %148 = vector.shape_cast %93 : vector<8x512xf32> to vector<1x8x512xf32>
    %149 = vector.shape_cast %110 : vector<8x512xf32> to vector<1x8x512xf32>
    %150 = vector.shape_cast %127 : vector<8x512xf32> to vector<1x8x512xf32>
    %151 = vector.shape_cast %129 : vector<8x512xf32> to vector<1x8x512xf32>
    %152 = tpu.concatenate %130, %131, %132, %133, %134, %135, %136, %137, %138, %139, %140, %141, %142, %143, %144, %145 in 0 : vector<1x8x512xf32>, vector<1x8x512xf32>, vector<1x8x512xf32>, vector<1x8x512xf32>, vector<1x8x512xf32>, vector<1x8x512xf32>, vector<1x8x512xf32>, vector<1x8x512xf32>, vector<1x8x512xf32>, vector<1x8x512xf32>, vector<1x8x512xf32>, vector<1x8x512xf32>, vector<1x8x512xf32>, vector<1x8x512xf32>, vector<1x8x512xf32>, vector<1x8x512xf32> -> vector<16x8x512xf32>
    %153 = tpu.concatenate %146, %147, %148, %149, %150, %151 in 0 : vector<1x8x512xf32>, vector<1x8x512xf32>, vector<1x8x512xf32>, vector<1x8x512xf32>, vector<1x8x512xf32>, vector<1x8x512xf32> -> vector<6x8x512xf32>
    %154 = tpu.concatenate %152, %153 in 0 : vector<16x8x512xf32>, vector<6x8x512xf32> -> vector<22x8x512xf32>
    %c0_61 = arith.constant 0 : index
    %c0_62 = arith.constant 0 : index
    %c0_63 = arith.constant 0 : index
    %155 = vector.load %arg11[%c0_61, %c0_62, %c0_63] : memref<22x8x512xf32, #tpu.memory_space<vmem>>, vector<22x8x512xf32>
    %156 = arith.addf %155, %154 : vector<22x8x512xf32>
    %c0_64 = arith.constant 0 : index
    %c0_65 = arith.constant 0 : index
    %c0_66 = arith.constant 0 : index
    %157 = vector.load %arg11[%c0_64, %c0_65, %c0_66] : memref<22x8x512xf32, #tpu.memory_space<vmem>>, vector<22x8x512xf32>
    tpu.vector_store %arg11[%c0_64, %c0_65, %c0_66], %156 {strides = array<i32>} : memref<22x8x512xf32, #tpu.memory_space<vmem>>, vector<22x8x512xf32>,
    return
  }
  func.func @transform_0(%arg0: i32, %arg1: i32) -> (i32, i32) {
    %c1_i32 = arith.constant 1 : i32
    %0 = arith.muli %arg0, %c1_i32 : i32
    %1 = arith.addi %0, %arg1 : i32
    %c0_i32 = arith.constant 0 : i32
    %c0_i32_0 = arith.constant 0 : i32
    return %1, %c0_i32 : i32, i32
  }
  func.func @transform_1(%arg0: i32, %arg1: i32) -> (i32, i32) {
    %c1_i32 = arith.constant 1 : i32
    %0 = arith.muli %arg0, %c1_i32 : i32
    %1 = arith.addi %0, %arg1 : i32
    %c0_i32 = arith.constant 0 : i32
    %c0_i32_0 = arith.constant 0 : i32
    return %1, %c0_i32 : i32, i32
  }
  func.func @transform_2(%arg0: i32, %arg1: i32) -> (i32, i32) {
    %c1_i32 = arith.constant 1 : i32
    %0 = arith.muli %arg0, %c1_i32 : i32
    %1 = arith.addi %0, %arg1 : i32
    %c0_i32 = arith.constant 0 : i32
    %c0_i32_0 = arith.constant 0 : i32
    return %1, %c0_i32 : i32, i32
  }
  func.func @transform_3(%arg0: i32, %arg1: i32) -> (i32, i32) {
    %c1_i32 = arith.constant 1 : i32
    %0 = arith.muli %arg0, %c1_i32 : i32
    %1 = arith.addi %0, %arg1 : i32
    %c0_i32 = arith.constant 0 : i32
    %c0_i32_0 = arith.constant 0 : i32
    return %1, %c0_i32 : i32, i32
  }
  func.func @transform_4(%arg0: i32, %arg1: i32) -> (i32, i32) {
    %c1_i32 = arith.constant 1 : i32
    %0 = arith.muli %arg0, %c1_i32 : i32
    %1 = arith.addi %0, %arg1 : i32
    %c0_i32 = arith.constant 0 : i32
    %c0_i32_0 = arith.constant 0 : i32
    return %1, %c0_i32 : i32, i32
  }
  func.func @transform_5(%arg0: i32, %arg1: i32) -> (i32, i32) {
    %c1_i32 = arith.constant 1 : i32
    %0 = arith.muli %arg0, %c1_i32 : i32
    %1 = arith.addi %0, %arg1 : i32
    %c0_i32 = arith.constant 0 : i32
    %c0_i32_0 = arith.constant 0 : i32
    return %1, %c0_i32 : i32, i32
  }
  func.func @transform_6(%arg0: i32, %arg1: i32) -> (i32, i32) {
    %c1_i32 = arith.constant 1 : i32
    %0 = arith.muli %arg0, %c1_i32 : i32
    %1 = arith.addi %0, %arg1 : i32
    %c0_i32 = arith.constant 0 : i32
    %c0_i32_0 = arith.constant 0 : i32
    return %1, %c0_i32 : i32, i32
  }
  func.func @transform_7(%arg0: i32, %arg1: i32) -> (i32, i32) {
    %c1_i32 = arith.constant 1 : i32
    %0 = arith.muli %arg0, %c1_i32 : i32
    %1 = arith.addi %0, %arg1 : i32
    %c0_i32 = arith.constant 0 : i32
    %c0_i32_0 = arith.constant 0 : i32
    return %1, %c0_i32 : i32, i32
  }
  func.func @transform_8(%arg0: i32, %arg1: i32) -> (i32, i32) {
    %c1_i32 = arith.constant 1 : i32
    %0 = arith.muli %arg0, %c1_i32 : i32
    %1 = arith.addi %0, %arg1 : i32
    %c0_i32 = arith.constant 0 : i32
    %c0_i32_0 = arith.constant 0 : i32
    return %1, %c0_i32 : i32, i32
  }
  func.func @transform_9(%arg0: i32, %arg1: i32) -> (i32, i32, i32) {
    %c0_i32 = arith.constant 0 : i32
    %c0_i32_0 = arith.constant 0 : i32
    %c0_i32_1 = arith.constant 0 : i32
    return %arg0, %c0_i32, %c0_i32_0 : i32, i32, i32
  }
}

</mosaic_0001>

<llo_original>
// kernel: tpu_custom_call.1
$region0: #{tpu_custom_call.1}
  #allocation0 [shape = 'u32[]', space=smem, size = 0x4, offset = 0x4, fixed_abs, tag = 'smem constant byte address 0x4 - core index']
  #allocation1 [shape = 'u32[72,128]{1,0:T(1,128)}', space=vmem, size = 0x9000, scoped, tag = 'internal scratch']
  %s0 = inlined_call_operand.hbm [shape: f32[32,512], index: 0, kind: input, shape index: {}]
  %s1 = inlined_call_operand.hbm [shape: f32[32,512], index: 1, kind: input, shape index: {}]
  %s2 = inlined_call_operand.hbm [shape: f32[32,512], index: 2, kind: input, shape index: {}]
  %s3 = inlined_call_operand.hbm [shape: f32[32,512], index: 3, kind: input, shape index: {}]
  %s4 = inlined_call_operand.hbm [shape: f32[32,512], index: 4, kind: input, shape index: {}]
  %s5 = inlined_call_operand.hbm [shape: f32[32,512], index: 5, kind: input, shape index: {}]
  %s6 = inlined_call_operand.hbm [shape: f32[32,512], index: 6, kind: input, shape index: {}]
  %s7 = inlined_call_operand.hbm [shape: bf16[32,512], index: 7, kind: input, shape index: {}]
  %s8 = inlined_call_operand.hbm [shape: bf16[32,512], index: 8, kind: input, shape index: {}]
  %s9 = inlined_call_operand.hbm [shape: f32[44,8,512], index: 9, kind: output, shape index: {}]
  %s10 = sld [smem:[#allocation0]]
  $region109: #{tpu_custom_call.1} parent=0
    _
  %s12 = ssub.s32 1, %s10
  %s13 = scalar_select 0, %s12, %s10
  $region1: #{tpu_custom_call.1} parent=0
    #allocation2 [shape = 'u8[65536]{0}', space=vmem, size = 0x10000, scoped, tag = 'input window, operand 0']
    #allocation3 [shape = 's32[2]{0}', space=sflag, size = 0x8, scoped, tag = 'scoped memory for tpu_custom_call.1']
    #allocation4 [shape = 's32[2]{0}', space=sflag, size = 0x8, scoped, tag = 'scoped memory for tpu_custom_call.1']
    #allocation5 [shape = 'u8[65536]{0}', space=vmem, size = 0x10000, scoped, tag = 'input window, operand 1']
    #allocation6 [shape = 's32[2]{0}', space=sflag, size = 0x8, scoped, tag = 'scoped memory for tpu_custom_call.1']
    #allocation7 [shape = 'u8[65536]{0}', space=vmem, size = 0x10000, scoped, tag = 'input window, operand 2']
    #allocation8 [shape = 'u8[65536]{0}', space=vmem, size = 0x10000, scoped, tag = 'input window, operand 3']
    #allocation9 [shape = 's32[2]{0}', space=sflag, size = 0x8, scoped, tag = 'scoped memory for tpu_custom_call.1']
    #allocation10 [shape = 'u8[65536]{0}', space=vmem, size = 0x10000, scoped, tag = 'input window, operand 4']
    #allocation11 [shape = 'u8[65536]{0}', space=vmem, size = 0x10000, scoped, tag = 'input window, operand 5']
    #allocation12 [shape = 's32[2]{0}', space=sflag, size = 0x8, scoped, tag = 'scoped memory for tpu_custom_call.1']
    #allocation13 [shape = 'u8[65536]{0}', space=vmem, size = 0x10000, scoped, tag = 'input window, operand 6']
    #allocation14 [shape = 'u8[32768]{0}', space=vmem, size = 0x8000, scoped, tag = 'input window, operand 7']
    #allocation15 [shape = 's32[2]{0}', space=sflag, size = 0x8, scoped, tag = 'scoped memory for tpu_custom_call.1']
    #allocation16 [shape = 'u8[32768]{0}', space=vmem, size = 0x8000, scoped, tag = 'input window, operand 8']
    #allocation17 [shape = 'u8[720896]{0}', space=vmem, size = 0xb0000, scoped, tag = 'output window, operand 0']
    %14 = vsyncpa [#allocation3], 0
    %s15 = scalar_lea.sflag [#allocation3], 1
    %16 = vsyncpa %s15, 0
    %17 = vsyncpa [#allocation6], 0
    %s18 = scalar_lea.sflag [#allocation6], 1
    %19 = vsyncpa %s18, 0
    %20 = vsyncpa [#allocation9], 0
    %s21 = scalar_lea.sflag [#allocation9], 1
    %22 = vsyncpa %s21, 0
    %23 = vsyncpa [#allocation12], 0
    %s24 = scalar_lea.sflag [#allocation12], 1
    %25 = vsyncpa %s24, 0
    %26 = vsyncpa [#allocation15], 0
    %s27 = scalar_lea.sflag [#allocation15], 1
    %28 = vsyncpa %s27, 0
    %29 = vsyncpa [#allocation4], 0
    %s30 = scalar_lea.sflag [#allocation4], 1
    %31 = vsyncpa %s30, 0
    loop: start=0, step=1, limit=4
    $region2: #{tpu_custom_call.1} parent=1 // loop_pre_header
      _
    $region3: #{tpu_custom_call.1} parent=1 // loop_header
      %s33 = sphi 0, %s37
      %p34 = scmp.ge.s32.totalorder %s33, 4
      %s40 = sphi 0, %s52
      %s41 = sphi 0, %s48
      %s42 = sphi 0, %s40
      %s43 = sphi 0, %s41
      %s44 = sphi 0, %s42
      %s45 = sphi 0, %s43
      %s57 = sphi 0, %s59
      %s60 = sphi 0, %s57
      %s61 = sphi 0, %s60
      %s77 = sphi 0, %s61
      %s85 = sphi 0, %s87
      %s88 = sphi 0, %s85
      %s89 = sphi 0, %s88
      %s105 = sphi 0, %s89
      %s113 = sphi 0, %s115
      %s116 = sphi 0, %s113
      %s117 = sphi 0, %s116
      %s133 = sphi 0, %s117
      %s141 = sphi 0, %s143
      %s144 = sphi 0, %s141
      %s145 = sphi 0, %s144
      %s161 = sphi 0, %s145
      %s169 = sphi 0, %s171
      %s172 = sphi 0, %s169
      %s173 = sphi 0, %s172
      %s189 = sphi 0, %s173
      %s197 = sphi 0, %s199
      %s200 = sphi 0, %s197
      %s201 = sphi 0, %s200
      %s217 = sphi 0, %s201
      %s225 = sphi 0, %s227
      %s228 = sphi 0, %s225
      %s229 = sphi 0, %s228
      %s245 = sphi 0, %s229
      %s253 = sphi 0, %s255
      %s256 = sphi 0, %s253
      %s257 = sphi 0, %s256
      %s273 = sphi 0, %s257
      %s281 = sphi 0, %s283
      %s284 = sphi 0, %s281
      %s285 = sphi 0, %s284
      %s301 = sphi 0, %s285
      %s307 = sphi 0, %s309
      %s310 = sphi 0, %s307
      %s311 = sphi 0, %s310
      %s327 = sphi 0, %s311
    $region4: #{tpu_custom_call.1} parent=1 // loop_header_branch
      %36 = sbr.rel (%p34) target = $region8
    $region5: #{tpu_custom_call.1} parent=1 // loop_body
      %s38 = ssub.s32 %s33, 1
      %s39 = ssub.s32 %s33, 2
      %s46 = sadd.s32 1, %s41
      %p47 = scmp.ge.s32.totalorder %s46, 1
      %s48 = scalar_select %p47, 0, %s46
      %s49 = sadd.s32 1, %s40
      %s50 = scalar_select %p47, %s49, %s40
      %p51 = scmp.ge.s32.totalorder %s50, 2
      %s52 = scalar_select %p51, 0, %s50
      %s53 = sadd.s32 %s40, %s41
      %s54 = sadd.s32 %s52, %s48
      %s55 = ssub.s32 %s53, %s54
      %p56 = scmp.eq.s32.totalorder %s55, 0
      %s58 = sadd.s32 %s57, 1
      %s59 = scalar_select %p56, %s57, %s58
      %p62 = pneg %p56
      %p63 = scmp.eq.s32.totalorder %s33, 1
      %p64 = por %p62, %p63
      %p65 = scmp.ne.s32.totalorder %s57, %s60
      %p66 = scmp.eq.s32.totalorder %s33, 0
      %p67 = por %p65, %p66
      %p68 = scmp.ne.s32.totalorder %s57, %s60
      %p69 = scmp.eq.s32.totalorder %s38, 1
      %p70 = por %p68, %p69
      %p71 = scmp.ne.s32.totalorder %s60, %s61
      %p72 = scmp.eq.s32.totalorder %s38, 0
      %p73 = por %p71, %p72
      %p74 = scmp.ne.s32.totalorder %s60, %s61
      %p75 = scmp.eq.s32.totalorder %s39, 1
      %p76 = por %p74, %p75
      %p78 = scmp.ne.s32.totalorder %s61, %s77
      %p79 = scmp.eq.s32.totalorder %s39, 0
      %p80 = por %p78, %p79
      %s81 = sadd.s32 %s40, %s41
      %s82 = sadd.s32 %s52, %s48
      %s83 = ssub.s32 %s81, %s82
      %p84 = scmp.eq.s32.totalorder %s83, 0
      %s86 = sadd.s32 %s85, 1
      %s87 = scalar_select %p84, %s85, %s86
      %p90 = pneg %p84
      %p91 = scmp.eq.s32.totalorder %s33, 1
      %p92 = por %p90, %p91
      %p93 = scmp.ne.s32.totalorder %s85, %s88
      %p94 = scmp.eq.s32.totalorder %s33, 0
      %p95 = por %p93, %p94
      %p96 = scmp.ne.s32.totalorder %s85, %s88
      %p97 = scmp.eq.s32.totalorder %s38, 1
      %p98 = por %p96, %p97
      %p99 = scmp.ne.s32.totalorder %s88, %s89
      %p100 = scmp.eq.s32.totalorder %s38, 0
      %p101 = por %p99, %p100
      %p102 = scmp.ne.s32.totalorder %s88, %s89
      %p103 = scmp.eq.s32.totalorder %s39, 1
      %p104 = por %p102, %p103
      %p106 = scmp.ne.s32.totalorder %s89, %s105
      %p107 = scmp.eq.s32.totalorder %s39, 0
      %p108 = por %p106, %p107
      %s109 = sadd.s32 %s40, %s41
      %s110 = sadd.s32 %s52, %s48
      %s111 = ssub.s32 %s109, %s110
      %p112 = scmp.eq.s32.totalorder %s111, 0
      %s114 = sadd.s32 %s113, 1
      %s115 = scalar_select %p112, %s113, %s114
      %p118 = pneg %p112
      %p119 = scmp.eq.s32.totalorder %s33, 1
      %p120 = por %p118, %p119
      %p121 = scmp.ne.s32.totalorder %s113, %s116
      %p122 = scmp.eq.s32.totalorder %s33, 0
      %p123 = por %p121, %p122
      %p124 = scmp.ne.s32.totalorder %s113, %s116
      %p125 = scmp.eq.s32.totalorder %s38, 1
      %p126 = por %p124, %p125
      %p127 = scmp.ne.s32.totalorder %s116, %s117
      %p128 = scmp.eq.s32.totalorder %s38, 0
      %p129 = por %p127, %p128
      %p130 = scmp.ne.s32.totalorder %s116, %s117
      %p131 = scmp.eq.s32.totalorder %s39, 1
      %p132 = por %p130, %p131
      %p134 = scmp.ne.s32.totalorder %s117, %s133
      %p135 = scmp.eq.s32.totalorder %s39, 0
      %p136 = por %p134, %p135
      %s137 = sadd.s32 %s40, %s41
      %s138 = sadd.s32 %s52, %s48
      %s139 = ssub.s32 %s137, %s138
      %p140 = scmp.eq.s32.totalorder %s139, 0
      %s142 = sadd.s32 %s141, 1
      %s143 = scalar_select %p140, %s141, %s142
      %p146 = pneg %p140
      %p147 = scmp.eq.s32.totalorder %s33, 1
      %p148 = por %p146, %p147
      %p149 = scmp.ne.s32.totalorder %s141, %s144
      %p150 = scmp.eq.s32.totalorder %s33, 0
      %p151 = por %p149, %p150
      %p152 = scmp.ne.s32.totalorder %s141, %s144
      %p153 = scmp.eq.s32.totalorder %s38, 1
      %p154 = por %p152, %p153
      %p155 = scmp.ne.s32.totalorder %s144, %s145
      %p156 = scmp.eq.s32.totalorder %s38, 0
      %p157 = por %p155, %p156
      %p158 = scmp.ne.s32.totalorder %s144, %s145
      %p159 = scmp.eq.s32.totalorder %s39, 1
      %p160 = por %p158, %p159
      %p162 = scmp.ne.s32.totalorder %s145, %s161
      %p163 = scmp.eq.s32.totalorder %s39, 0
      %p164 = por %p162, %p163
      %s165 = sadd.s32 %s40, %s41
      %s166 = sadd.s32 %s52, %s48
      %s167 = ssub.s32 %s165, %s166
      %p168 = scmp.eq.s32.totalorder %s167, 0
      %s170 = sadd.s32 %s169, 1
      %s171 = scalar_select %p168, %s169, %s170
      %p174 = pneg %p168
      %p175 = scmp.eq.s32.totalorder %s33, 1
      %p176 = por %p174, %p175
      %p177 = scmp.ne.s32.totalorder %s169, %s172
      %p178 = scmp.eq.s32.totalorder %s33, 0
      %p179 = por %p177, %p178
      %p180 = scmp.ne.s32.totalorder %s169, %s172
      %p181 = scmp.eq.s32.totalorder %s38, 1
      %p182 = por %p180, %p181
      %p183 = scmp.ne.s32.totalorder %s172, %s173
      %p184 = scmp.eq.s32.totalorder %s38, 0
      %p185 = por %p183, %p184
      %p186 = scmp.ne.s32.totalorder %s172, %s173
      %p187 = scmp.eq.s32.totalorder %s39, 1
      %p188 = por %p186, %p187
      %p190 = scmp.ne.s32.totalorder %s173, %s189
      %p191 = scmp.eq.s32.totalorder %s39, 0
      %p192 = por %p190, %p191
      %s193 = sadd.s32 %s40, %s41
      %s194 = sadd.s32 %s52, %s48
      %s195 = ssub.s32 %s193, %s194
      %p196 = scmp.eq.s32.totalorder %s195, 0
      %s198 = sadd.s32 %s197, 1
      %s199 = scalar_select %p196, %s197, %s198
      %p202 = pneg %p196
      %p203 = scmp.eq.s32.totalorder %s33, 1
      %p204 = por %p202, %p203
      %p205 = scmp.ne.s32.totalorder %s197, %s200
      %p206 = scmp.eq.s32.totalorder %s33, 0
      %p207 = por %p205, %p206
      %p208 = scmp.ne.s32.totalorder %s197, %s200
      %p209 = scmp.eq.s32.totalorder %s38, 1
      %p210 = por %p208, %p209
      %p211 = scmp.ne.s32.totalorder %s200, %s201
      %p212 = scmp.eq.s32.totalorder %s38, 0
      %p213 = por %p211, %p212
      %p214 = scmp.ne.s32.totalorder %s200, %s201
      %p215 = scmp.eq.s32.totalorder %s39, 1
      %p216 = por %p214, %p215
      %p218 = scmp.ne.s32.totalorder %s201, %s217
      %p219 = scmp.eq.s32.totalorder %s39, 0
      %p220 = por %p218, %p219
      %s221 = sadd.s32 %s40, %s41
      %s222 = sadd.s32 %s52, %s48
      %s223 = ssub.s32 %s221, %s222
      %p224 = scmp.eq.s32.totalorder %s223, 0
      %s226 = sadd.s32 %s225, 1
      %s227 = scalar_select %p224, %s225, %s226
      %p230 = pneg %p224
      %p231 = scmp.eq.s32.totalorder %s33, 1
      %p232 = por %p230, %p231
      %p233 = scmp.ne.s32.totalorder %s225, %s228
      %p234 = scmp.eq.s32.totalorder %s33, 0
      %p235 = por %p233, %p234
      %p236 = scmp.ne.s32.totalorder %s225, %s228
      %p237 = scmp.eq.s32.totalorder %s38, 1
      %p238 = por %p236, %p237
      %p239 = scmp.ne.s32.totalorder %s228, %s229
      %p240 = scmp.eq.s32.totalorder %s38, 0
      %p241 = por %p239, %p240
      %p242 = scmp.ne.s32.totalorder %s228, %s229
      %p243 = scmp.eq.s32.totalorder %s39, 1
      %p244 = por %p242, %p243
      %p246 = scmp.ne.s32.totalorder %s229, %s245
      %p247 = scmp.eq.s32.totalorder %s39, 0
      %p248 = por %p246, %p247
      %s249 = sadd.s32 %s40, %s41
      %s250 = sadd.s32 %s52, %s48
      %s251 = ssub.s32 %s249, %s250
      %p252 = scmp.eq.s32.totalorder %s251, 0
      %s254 = sadd.s32 %s253, 1
      %s255 = scalar_select %p252, %s253, %s254
      %p258 = pneg %p252
      %p259 = scmp.eq.s32.totalorder %s33, 1
      %p260 = por %p258, %p259
      %p261 = scmp.ne.s32.totalorder %s253, %s256
      %p262 = scmp.eq.s32.totalorder %s33, 0
      %p263 = por %p261, %p262
      %p264 = scmp.ne.s32.totalorder %s253, %s256
      %p265 = scmp.eq.s32.totalorder %s38, 1
      %p266 = por %p264, %p265
      %p267 = scmp.ne.s32.totalorder %s256, %s257
      %p268 = scmp.eq.s32.totalorder %s38, 0
      %p269 = por %p267, %p268
      %p270 = scmp.ne.s32.totalorder %s256, %s257
      %p271 = scmp.eq.s32.totalorder %s39, 1
      %p272 = por %p270, %p271
      %p274 = scmp.ne.s32.totalorder %s257, %s273
      %p275 = scmp.eq.s32.totalorder %s39, 0
      %p276 = por %p274, %p275
      %s277 = sadd.s32 %s40, %s41
      %s278 = sadd.s32 %s52, %s48
      %s279 = ssub.s32 %s277, %s278
      %p280 = scmp.eq.s32.totalorder %s279, 0
      %s282 = sadd.s32 %s281, 1
      %s283 = scalar_select %p280, %s281, %s282
      %p286 = pneg %p280
      %p287 = scmp.eq.s32.totalorder %s33, 1
      %p288 = por %p286, %p287
      %p289 = scmp.ne.s32.totalorder %s281, %s284
      %p290 = scmp.eq.s32.totalorder %s33, 0
      %p291 = por %p289, %p290
      %p292 = scmp.ne.s32.totalorder %s281, %s284
      %p293 = scmp.eq.s32.totalorder %s38, 1
      %p294 = por %p292, %p293
      %p295 = scmp.ne.s32.totalorder %s284, %s285
      %p296 = scmp.eq.s32.totalorder %s38, 0
      %p297 = por %p295, %p296
      %p298 = scmp.ne.s32.totalorder %s284, %s285
      %p299 = scmp.eq.s32.totalorder %s39, 1
      %p300 = por %p298, %p299
      %p302 = scmp.ne.s32.totalorder %s285, %s301
      %p303 = scmp.eq.s32.totalorder %s39, 0
      %p304 = por %p302, %p303
      %s305 = ssub.s32 %s40, %s52
      %p306 = scmp.eq.s32.totalorder %s305, 0
      %s308 = sadd.s32 %s307, 1
      %s309 = scalar_select %p306, %s307, %s308
      %p312 = pneg %p306
      %p313 = scmp.eq.s32.totalorder %s33, 1
      %p314 = por %p312, %p313
      %p315 = scmp.ne.s32.totalorder %s307, %s310
      %p316 = scmp.eq.s32.totalorder %s33, 0
      %p317 = por %p315, %p316
      %p318 = scmp.ne.s32.totalorder %s307, %s310
      %p319 = scmp.eq.s32.totalorder %s38, 1
      %p320 = por %p318, %p319
      %p321 = scmp.ne.s32.totalorder %s310, %s311
      %p322 = scmp.eq.s32.totalorder %s38, 0
      %p323 = por %p321, %p322
      %p324 = scmp.ne.s32.totalorder %s310, %s311
      %p325 = scmp.eq.s32.totalorder %s39, 1
      %p326 = por %p324, %p325
      %p328 = scmp.ne.s32.totalorder %s311, %s327
      %p329 = scmp.eq.s32.totalorder %s39, 0
      %p330 = por %p328, %p329
      %p331 = scmp.le.s32.totalorder 1, %s33
      %p332 = scmp.lt.s32.totalorder %s33, 3
      %p333 = pnand %p331, %p332
      %p334 = pneg %p333
      // Predicated region
      $region9: #{tpu_custom_call.1} parent=5 // pred_check
        _
      $region10: #{tpu_custom_call.1} parent=5 // pred_check_branch
        %336 = sbr.rel (%p333) target = $region12
      $region11: #{tpu_custom_call.1} parent=5 // pred_region
        %s337 = ssub.s32 %s33, 1
      $region12: #{tpu_custom_call.1} parent=5 // pred_fallthru
        _
      %p338 = scmp.lt.s32.totalorder %s33, 2
      // Predicated region
      $region13: #{tpu_custom_call.1} parent=5 // pred_check
        %p339 = pneg %p338
      $region14: #{tpu_custom_call.1} parent=5 // pred_check_branch
        %341 = sbr.rel (%p339) target = $region16
      $region15: #{tpu_custom_call.1} parent=5 // pred_region
        // Predicated region
        $region17: #{tpu_custom_call.1} parent=15 // pred_check
          %p342 = pneg %p67
        $region18: #{tpu_custom_call.1} parent=15 // pred_check_branch
          %344 = sbr.rel (%p342) target = $region20
        $region19: #{tpu_custom_call.1} parent=15 // pred_region
          %s345 = sand.u32 %s57, 1
          %s346 = scalar_lea.sflag [#allocation3], %s345
          %s347 = sand.u32 %s57, 1
          %s348 = smul.addr %s347, 64
          %s349 = scalar_lea.vmem [#allocation2], %s348
          %s350 = sadd.s32 %s40, %s41
          %s351 = smul.u32 2, %s350
          %353 = vsyncadd %s346, 0
          %s354 = smul.addr %s351, 4
          %s355 = smul.addr %s354, 8
          %s356 = scalar_lea.hbm %s0, %s355
          %s357 = sshll.u32 %s356, 4
          %s358 = int_to_ptr.hbm [resolvable:$true] %s357
          %s359 = sshll.u32 %s349, 4
          %s360 = int_to_ptr.vmem [resolvable:$true] %s359
          %365 = dma.hbm_to_vmem [thread:$0]  %s358, 1024, %s360, %s346, 512, 512, 32
        $region20: #{tpu_custom_call.1} parent=15 // pred_fallthru
          _
        // Predicated region
        $region21: #{tpu_custom_call.1} parent=15 // pred_check
          %p366 = pneg %p95
        $region22: #{tpu_custom_call.1} parent=15 // pred_check_branch
          %368 = sbr.rel (%p366) target = $region24
        $region23: #{tpu_custom_call.1} parent=15 // pred_region
          %s369 = sand.u32 %s33, 1
          %s370 = scalar_lea.sflag [#allocation6], %s369
          %s371 = sand.u32 %s85, 1
          %s372 = smul.addr %s371, 64
          %s373 = scalar_lea.vmem [#allocation5], %s372
          %s374 = sadd.s32 %s40, %s41
          %s375 = smul.u32 2, %s374
          %377 = vsyncadd %s370, 0
          %s378 = smul.addr %s375, 4
          %s379 = smul.addr %s378, 8
          %s380 = scalar_lea.hbm %s1, %s379
          %s381 = sshll.u32 %s380, 4
          %s382 = int_to_ptr.hbm [resolvable:$true] %s381
          %s383 = sshll.u32 %s373, 4
          %s384 = int_to_ptr.vmem [resolvable:$true] %s383
          %389 = dma.hbm_to_vmem [thread:$0]  %s382, 1024, %s384, %s370, 512, 512, 32
        $region24: #{tpu_custom_call.1} parent=15 // pred_fallthru
          _
        // Predicated region
        $region25: #{tpu_custom_call.1} parent=15 // pred_check
          %p390 = pneg %p123
        $region26: #{tpu_custom_call.1} parent=15 // pred_check_branch
          %392 = sbr.rel (%p390) target = $region28
        $region27: #{tpu_custom_call.1} parent=15 // pred_region
          %s393 = sand.u32 %s33, 1
          %s394 = scalar_lea.sflag [#allocation6], %s393
          %s395 = sand.u32 %s113, 1
          %s396 = smul.addr %s395, 64
          %s397 = scalar_lea.vmem [#allocation7], %s396
          %s398 = sadd.s32 %s40, %s41
          %s399 = smul.u32 2, %s398
          %401 = vsyncadd %s394, 0
          %s402 = smul.addr %s399, 4
          %s403 = smul.addr %s402, 8
          %s404 = scalar_lea.hbm %s2, %s403
          %s405 = sshll.u32 %s404, 4
          %s406 = int_to_ptr.hbm [resolvable:$true] %s405
          %s407 = sshll.u32 %s397, 4
          %s408 = int_to_ptr.vmem [resolvable:$true] %s407
          %413 = dma.hbm_to_vmem [thread:$0]  %s406, 1024, %s408, %s394, 512, 512, 32
        $region28: #{tpu_custom_call.1} parent=15 // pred_fallthru
          _
        // Predicated region
        $region29: #{tpu_custom_call.1} parent=15 // pred_check
          %p414 = pneg %p151
        $region30: #{tpu_custom_call.1} parent=15 // pred_check_branch
          %416 = sbr.rel (%p414) target = $region32
        $region31: #{tpu_custom_call.1} parent=15 // pred_region
          %s417 = sand.u32 %s33, 1
          %s418 = scalar_lea.sflag [#allocation9], %s417
          %s419 = sand.u32 %s141, 1
          %s420 = smul.addr %s419, 64
          %s421 = scalar_lea.vmem [#allocation8], %s420
          %s422 = sadd.s32 %s40, %s41
          %s423 = smul.u32 2, %s422
          %425 = vsyncadd %s418, 0
          %s426 = smul.addr %s423, 4
          %s427 = smul.addr %s426, 8
          %s428 = scalar_lea.hbm %s3, %s427
          %s429 = sshll.u32 %s428, 4
          %s430 = int_to_ptr.hbm [resolvable:$true] %s429
          %s431 = sshll.u32 %s421, 4
          %s432 = int_to_ptr.vmem [resolvable:$true] %s431
          %437 = dma.hbm_to_vmem [thread:$0]  %s430, 1024, %s432, %s418, 512, 512, 32
        $region32: #{tpu_custom_call.1} parent=15 // pred_fallthru
          _
        // Predicated region
        $region33: #{tpu_custom_call.1} parent=15 // pred_check
          %p438 = pneg %p179
        $region34: #{tpu_custom_call.1} parent=15 // pred_check_branch
          %440 = sbr.rel (%p438) target = $region36
        $region35: #{tpu_custom_call.1} parent=15 // pred_region
          %s441 = sand.u32 %s33, 1
          %s442 = scalar_lea.sflag [#allocation9], %s441
          %s443 = sand.u32 %s169, 1
          %s444 = smul.addr %s443, 64
          %s445 = scalar_lea.vmem [#allocation10], %s444
          %s446 = sadd.s32 %s40, %s41
          %s447 = smul.u32 2, %s446
          %449 = vsyncadd %s442, 0
          %s450 = smul.addr %s447, 4
          %s451 = smul.addr %s450, 8
          %s452 = scalar_lea.hbm %s4, %s451
          %s453 = sshll.u32 %s452, 4
          %s454 = int_to_ptr.hbm [resolvable:$true] %s453
          %s455 = sshll.u32 %s445, 4
          %s456 = int_to_ptr.vmem [resolvable:$true] %s455
          %461 = dma.hbm_to_vmem [thread:$0]  %s454, 1024, %s456, %s442, 512, 512, 32
        $region36: #{tpu_custom_call.1} parent=15 // pred_fallthru
          _
        // Predicated region
        $region37: #{tpu_custom_call.1} parent=15 // pred_check
          %p462 = pneg %p207
        $region38: #{tpu_custom_call.1} parent=15 // pred_check_branch
          %464 = sbr.rel (%p462) target = $region40
        $region39: #{tpu_custom_call.1} parent=15 // pred_region
          %s465 = sand.u32 %s33, 1
          %s466 = scalar_lea.sflag [#allocation12], %s465
          %s467 = sand.u32 %s197, 1
          %s468 = smul.addr %s467, 64
          %s469 = scalar_lea.vmem [#allocation11], %s468
          %s470 = sadd.s32 %s40, %s41
          %s471 = smul.u32 2, %s470
          %473 = vsyncadd %s466, 0
          %s474 = smul.addr %s471, 4
          %s475 = smul.addr %s474, 8
          %s476 = scalar_lea.hbm %s5, %s475
          %s477 = sshll.u32 %s476, 4
          %s478 = int_to_ptr.hbm [resolvable:$true] %s477
          %s479 = sshll.u32 %s469, 4
          %s480 = int_to_ptr.vmem [resolvable:$true] %s479
          %485 = dma.hbm_to_vmem [thread:$0]  %s478, 1024, %s480, %s466, 512, 512, 32
        $region40: #{tpu_custom_call.1} parent=15 // pred_fallthru
          _
        // Predicated region
        $region41: #{tpu_custom_call.1} parent=15 // pred_check
          %p486 = pneg %p235
        $region42: #{tpu_custom_call.1} parent=15 // pred_check_branch
          %488 = sbr.rel (%p486) target = $region44
        $region43: #{tpu_custom_call.1} parent=15 // pred_region
          %s489 = sand.u32 %s33, 1
          %s490 = scalar_lea.sflag [#allocation12], %s489
          %s491 = sand.u32 %s225, 1
          %s492 = smul.addr %s491, 64
          %s493 = scalar_lea.vmem [#allocation13], %s492
          %s494 = sadd.s32 %s40, %s41
          %s495 = smul.u32 2, %s494
          %497 = vsyncadd %s490, 0
          %s498 = smul.addr %s495, 4
          %s499 = smul.addr %s498, 8
          %s500 = scalar_lea.hbm %s6, %s499
          %s501 = sshll.u32 %s500, 4
          %s502 = int_to_ptr.hbm [resolvable:$true] %s501
          %s503 = sshll.u32 %s493, 4
          %s504 = int_to_ptr.vmem [resolvable:$true] %s503
          %509 = dma.hbm_to_vmem [thread:$0]  %s502, 1024, %s504, %s490, 512, 512, 32
        $region44: #{tpu_custom_call.1} parent=15 // pred_fallthru
          _
        // Predicated region
        $region45: #{tpu_custom_call.1} parent=15 // pred_check
          %p510 = pneg %p263
        $region46: #{tpu_custom_call.1} parent=15 // pred_check_branch
          %512 = sbr.rel (%p510) target = $region48
        $region47: #{tpu_custom_call.1} parent=15 // pred_region
          %s513 = sand.u32 %s33, 1
          %s514 = scalar_lea.sflag [#allocation15], %s513
          %s515 = sand.u32 %s253, 1
          %s516 = smul.addr %s515, 32
          %s517 = scalar_lea.vmem [#allocation14], %s516
          %s518 = sadd.s32 %s40, %s41
          %s519 = smul.u32 2, %s518
          %521 = vsyncadd %s514, 0
          %s522 = smul.addr %s519, 4
          %s523 = smul.addr %s522, 4
          %s524 = scalar_lea.hbm %s7, %s523
          %s525 = sshll.u32 %s524, 4
          %s526 = int_to_ptr.hbm [resolvable:$true] %s525
          %s527 = sshll.u32 %s517, 4
          %s528 = int_to_ptr.vmem [resolvable:$true] %s527
          %533 = dma.hbm_to_vmem [thread:$0]  %s526, 512, %s528, %s514, 256, 256, 16
        $region48: #{tpu_custom_call.1} parent=15 // pred_fallthru
          _
        // Predicated region
        $region49: #{tpu_custom_call.1} parent=15 // pred_check
          %p534 = pneg %p291
        $region50: #{tpu_custom_call.1} parent=15 // pred_check_branch
          %536 = sbr.rel (%p534) target = $region52
        $region51: #{tpu_custom_call.1} parent=15 // pred_region
          %s537 = sand.u32 %s33, 1
          %s538 = scalar_lea.sflag [#allocation15], %s537
          %s539 = sand.u32 %s281, 1
          %s540 = smul.addr %s539, 32
          %s541 = scalar_lea.vmem [#allocation16], %s540
          %s542 = sadd.s32 %s40, %s41
          %s543 = smul.u32 2, %s542
          %545 = vsyncadd %s538, 0
          %s546 = smul.addr %s543, 4
          %s547 = smul.addr %s546, 4
          %s548 = scalar_lea.hbm %s8, %s547
          %s549 = sshll.u32 %s548, 4
          %s550 = int_to_ptr.hbm [resolvable:$true] %s549
          %s551 = sshll.u32 %s541, 4
          %s552 = int_to_ptr.vmem [resolvable:$true] %s551
          %557 = dma.hbm_to_vmem [thread:$0]  %s550, 512, %s552, %s538, 256, 256, 16
        $region52: #{tpu_custom_call.1} parent=15 // pred_fallthru
          _
      $region16: #{tpu_custom_call.1} parent=5 // pred_fallthru
        _
      %p558 = scmp.le.s32.totalorder 1, %s33
      %p559 = scmp.lt.s32.totalorder %s33, 3
      %p560 = pnand %p558, %p559
      %p561 = pneg %p560
      // Predicated region
      $region53: #{tpu_custom_call.1} parent=5 // pred_check
        _
      $region54: #{tpu_custom_call.1} parent=5 // pred_check_branch
        %563 = sbr.rel (%p560) target = $region56
      $region55: #{tpu_custom_call.1} parent=5 // pred_region
        %s564 = ssub.s32 %s33, 1
        %s565 = sand.u32 %s60, 1
        %s566 = scalar_lea.sflag [#allocation3], %s565
        %s567 = sand.u32 %s60, 1
        %s568 = smul.addr %s567, 64
        %s569 = scalar_lea.vmem [#allocation2], %s568
        // Predicated region
        $region57: #{tpu_custom_call.1} parent=55 // pred_check
          %p570 = pneg %p73
        $region58: #{tpu_custom_call.1} parent=55 // pred_check_branch
          %572 = sbr.rel (%p570) target = $region60
        $region59: #{tpu_custom_call.1} parent=55 // pred_region
          %574 = dma.done %s566, 1024
        $region60: #{tpu_custom_call.1} parent=55 // pred_fallthru
          _
        %s575 = sand.u32 %s38, 1
        %s576 = scalar_lea.sflag [#allocation6], %s575
        %s577 = sand.u32 %s88, 1
        %s578 = smul.addr %s577, 64
        %s579 = scalar_lea.vmem [#allocation5], %s578
        // Predicated region
        $region61: #{tpu_custom_call.1} parent=55 // pred_check
          %p580 = pneg %p101
        $region62: #{tpu_custom_call.1} parent=55 // pred_check_branch
          %582 = sbr.rel (%p580) target = $region64
        $region63: #{tpu_custom_call.1} parent=55 // pred_region
          %584 = dma.done %s576, 1024
        $region64: #{tpu_custom_call.1} parent=55 // pred_fallthru
          _
        %s585 = sand.u32 %s38, 1
        %s586 = scalar_lea.sflag [#allocation6], %s585
        %s587 = sand.u32 %s116, 1
        %s588 = smul.addr %s587, 64
        %s589 = scalar_lea.vmem [#allocation7], %s588
        // Predicated region
        $region65: #{tpu_custom_call.1} parent=55 // pred_check
          %p590 = pneg %p129
        $region66: #{tpu_custom_call.1} parent=55 // pred_check_branch
          %592 = sbr.rel (%p590) target = $region68
        $region67: #{tpu_custom_call.1} parent=55 // pred_region
          %594 = dma.done %s586, 1024
        $region68: #{tpu_custom_call.1} parent=55 // pred_fallthru
          _
        %s595 = sand.u32 %s38, 1
        %s596 = scalar_lea.sflag [#allocation9], %s595
        %s597 = sand.u32 %s144, 1
        %s598 = smul.addr %s597, 64
        %s599 = scalar_lea.vmem [#allocation8], %s598
        // Predicated region
        $region69: #{tpu_custom_call.1} parent=55 // pred_check
          %p600 = pneg %p157
        $region70: #{tpu_custom_call.1} parent=55 // pred_check_branch
          %602 = sbr.rel (%p600) target = $region72
        $region71: #{tpu_custom_call.1} parent=55 // pred_region
          %604 = dma.done %s596, 1024
        $region72: #{tpu_custom_call.1} parent=55 // pred_fallthru
          _
        %s605 = sand.u32 %s38, 1
        %s606 = scalar_lea.sflag [#allocation9], %s605
        %s607 = sand.u32 %s172, 1
        %s608 = smul.addr %s607, 64
        %s609 = scalar_lea.vmem [#allocation10], %s608
        // Predicated region
        $region73: #{tpu_custom_call.1} parent=55 // pred_check
          %p610 = pneg %p185
        $region74: #{tpu_custom_call.1} parent=55 // pred_check_branch
          %612 = sbr.rel (%p610) target = $region76
        $region75: #{tpu_custom_call.1} parent=55 // pred_region
          %614 = dma.done %s606, 1024
        $region76: #{tpu_custom_call.1} parent=55 // pred_fallthru
          _
        %s615 = sand.u32 %s38, 1
        %s616 = scalar_lea.sflag [#allocation12], %s615
        %s617 = sand.u32 %s200, 1
        %s618 = smul.addr %s617, 64
        %s619 = scalar_lea.vmem [#allocation11], %s618
        // Predicated region
        $region77: #{tpu_custom_call.1} parent=55 // pred_check
          %p620 = pneg %p213
        $region78: #{tpu_custom_call.1} parent=55 // pred_check_branch
          %622 = sbr.rel (%p620) target = $region80
        $region79: #{tpu_custom_call.1} parent=55 // pred_region
          %624 = dma.done %s616, 1024
        $region80: #{tpu_custom_call.1} parent=55 // pred_fallthru
          _
        %s625 = sand.u32 %s38, 1
        %s626 = scalar_lea.sflag [#allocation12], %s625
        %s627 = sand.u32 %s228, 1
        %s628 = smul.addr %s627, 64
        %s629 = scalar_lea.vmem [#allocation13], %s628
        // Predicated region
        $region81: #{tpu_custom_call.1} parent=55 // pred_check
          %p630 = pneg %p241
        $region82: #{tpu_custom_call.1} parent=55 // pred_check_branch
          %632 = sbr.rel (%p630) target = $region84
        $region83: #{tpu_custom_call.1} parent=55 // pred_region
          %634 = dma.done %s626, 1024
        $region84: #{tpu_custom_call.1} parent=55 // pred_fallthru
          _
        %s635 = sand.u32 %s38, 1
        %s636 = scalar_lea.sflag [#allocation15], %s635
        %s637 = sand.u32 %s256, 1
        %s638 = smul.addr %s637, 32
        %s639 = scalar_lea.vmem [#allocation14], %s638
        // Predicated region
        $region85: #{tpu_custom_call.1} parent=55 // pred_check
          %p640 = pneg %p269
        $region86: #{tpu_custom_call.1} parent=55 // pred_check_branch
          %642 = sbr.rel (%p640) target = $region88
        $region87: #{tpu_custom_call.1} parent=55 // pred_region
          %644 = dma.done %s636, 512
        $region88: #{tpu_custom_call.1} parent=55 // pred_fallthru
          _
        %s645 = sand.u32 %s38, 1
        %s646 = scalar_lea.sflag [#allocation15], %s645
        %s647 = sand.u32 %s284, 1
        %s648 = smul.addr %s647, 32
        %s649 = scalar_lea.vmem [#allocation16], %s648
        // Predicated region
        $region89: #{tpu_custom_call.1} parent=55 // pred_check
          %p650 = pneg %p297
        $region90: #{tpu_custom_call.1} parent=55 // pred_check_branch
          %652 = sbr.rel (%p650) target = $region92
        $region91: #{tpu_custom_call.1} parent=55 // pred_region
          %654 = dma.done %s646, 512
        $region92: #{tpu_custom_call.1} parent=55 // pred_fallthru
          _
        %s655 = sand.u32 %s60, 1
        %s656 = scalar_lea.sflag [#allocation3], %s655
        %s657 = sand.u32 %s60, 1
        %s658 = smul.addr %s657, 64
        %s659 = scalar_lea.vmem [#allocation2], %s658
        %p660 = pneg %p73
        %p661 = pneg %p70
        %s662 = sand.u32 %s38, 1
        %s663 = scalar_lea.sflag [#allocation6], %s662
        %s664 = sand.u32 %s88, 1
        %s665 = smul.addr %s664, 64
        %s666 = scalar_lea.vmem [#allocation5], %s665
        %p667 = pneg %p101
        %p668 = pneg %p98
        %s669 = sand.u32 %s38, 1
        %s670 = scalar_lea.sflag [#allocation6], %s669
        %s671 = sand.u32 %s116, 1
        %s672 = smul.addr %s671, 64
        %s673 = scalar_lea.vmem [#allocation7], %s672
        %p674 = pneg %p129
        %p675 = pneg %p126
        %s676 = sand.u32 %s38, 1
        %s677 = scalar_lea.sflag [#allocation9], %s676
        %s678 = sand.u32 %s144, 1
        %s679 = smul.addr %s678, 64
        %s680 = scalar_lea.vmem [#allocation8], %s679
        %p681 = pneg %p157
        %p682 = pneg %p154
        %s683 = sand.u32 %s38, 1
        %s684 = scalar_lea.sflag [#allocation9], %s683
        %s685 = sand.u32 %s172, 1
        %s686 = smul.addr %s685, 64
        %s687 = scalar_lea.vmem [#allocation10], %s686
        %p688 = pneg %p185
        %p689 = pneg %p182
        %s690 = sand.u32 %s38, 1
        %s691 = scalar_lea.sflag [#allocation12], %s690
        %s692 = sand.u32 %s200, 1
        %s693 = smul.addr %s692, 64
        %s694 = scalar_lea.vmem [#allocation11], %s693
        %p695 = pneg %p213
        %p696 = pneg %p210
        %s697 = sand.u32 %s38, 1
        %s698 = scalar_lea.sflag [#allocation12], %s697
        %s699 = sand.u32 %s228, 1
        %s700 = smul.addr %s699, 64
        %s701 = scalar_lea.vmem [#allocation13], %s700
        %p702 = pneg %p241
        %p703 = pneg %p238
        %s704 = sand.u32 %s38, 1
        %s705 = scalar_lea.sflag [#allocation15], %s704
        %s706 = sand.u32 %s256, 1
        %s707 = smul.addr %s706, 32
        %s708 = scalar_lea.vmem [#allocation14], %s707
        %p709 = pneg %p269
        %p710 = pneg %p266
        %s711 = sand.u32 %s38, 1
        %s712 = scalar_lea.sflag [#allocation15], %s711
        %s713 = sand.u32 %s284, 1
        %s714 = smul.addr %s713, 32
        %s715 = scalar_lea.vmem [#allocation16], %s714
        %p716 = pneg %p297
        %p717 = pneg %p294
        %p718 = pneg %p323
        %p719 = pneg %p320
        %s720 = sand.u32 %s310, 1
        %s721 = scalar_lea.sflag [#allocation4], %s720
        %s722 = sand.u32 %s310, 1
        %s723 = smul.addr %s722, 704
        %s724 = scalar_lea.vmem [#allocation17], %s723
        %s725 = sadd.s32 %s42, %s43
        %s726 = smul.u32 2, %s725
        %s727 = sadd.s32 %s42, %s43
        %s728 = smul.u32 2, %s727
        %s729 = sadd.s32 %s42, %s43
        %s730 = smul.u32 2, %s729
        %s731 = sadd.s32 %s42, %s43
        %s732 = smul.u32 2, %s731
        %s733 = sadd.s32 %s42, %s43
        %s734 = smul.u32 2, %s733
        %s735 = sadd.s32 %s42, %s43
        %s736 = smul.u32 2, %s735
        %s737 = sadd.s32 %s42, %s43
        %s738 = smul.u32 2, %s737
        %s739 = sadd.s32 %s42, %s43
        %s740 = smul.u32 2, %s739
        %s741 = sadd.s32 %s42, %s43
        %s742 = smul.u32 2, %s741
        %s743 = smul.u32 22, %s42
        %p744 = scmp.eq.s32.totalorder %s43, 0
        // Predicated region
        $region93: #{tpu_custom_call.1} parent=55 // pred_check
          %p745 = pneg %p744
        $region94: #{tpu_custom_call.1} parent=55 // pred_check_branch
          %747 = sbr.rel (%p745) target = $region96
        $region95: #{tpu_custom_call.1} parent=55 // pred_region
          %748 = vst [vmem:[%s724] sm:$0xff] 0.0
          %749 = vst [vmem:[%s724 + $0x8] sm:$0xff] 0.0
          %750 = vst [vmem:[%s724 + $0x10] sm:$0xff] 0.0
          %751 = vst [vmem:[%s724 + $0x18] sm:$0xff] 0.0
          %752 = vst [vmem:[%s724 + $0x20] sm:$0xff] 0.0
          %753 = vst [vmem:[%s724 + $0x28] sm:$0xff] 0.0
          %754 = vst [vmem:[%s724 + $0x30] sm:$0xff] 0.0
          %755 = vst [vmem:[%s724 + $0x38] sm:$0xff] 0.0
          %756 = vst [vmem:[%s724 + $0x40] sm:$0xff] 0.0
          %757 = vst [vmem:[%s724 + $0x48] sm:$0xff] 0.0
          %758 = vst [vmem:[%s724 + $0x50] sm:$0xff] 0.0
          %759 = vst [vmem:[%s724 + $0x58] sm:$0xff] 0.0
          %760 = vst [vmem:[%s724 + $0x60] sm:$0xff] 0.0
          %761 = vst [vmem:[%s724 + $0x68] sm:$0xff] 0.0
          %762 = vst [vmem:[%s724 + $0x70] sm:$0xff] 0.0
          %763 = vst [vmem:[%s724 + $0x78] sm:$0xff] 0.0
          %764 = vst [vmem:[%s724 + $0x80] sm:$0xff] 0.0
          %765 = vst [vmem:[%s724 + $0x88] sm:$0xff] 0.0
          %766 = vst [vmem:[%s724 + $0x90] sm:$0xff] 0.0
          %767 = vst [vmem:[%s724 + $0x98] sm:$0xff] 0.0
          %768 = vst [vmem:[%s724 + $0xa0] sm:$0xff] 0.0
          %769 = vst [vmem:[%s724 + $0xa8] sm:$0xff] 0.0
          %770 = vst [vmem:[%s724 + $0xb0] sm:$0xff] 0.0
          %771 = vst [vmem:[%s724 + $0xb8] sm:$0xff] 0.0
          %772 = vst [vmem:[%s724 + $0xc0] sm:$0xff] 0.0
          %773 = vst [vmem:[%s724 + $0xc8] sm:$0xff] 0.0
          %774 = vst [vmem:[%s724 + $0xd0] sm:$0xff] 0.0
          %775 = vst [vmem:[%s724 + $0xd8] sm:$0xff] 0.0
          %776 = vst [vmem:[%s724 + $0xe0] sm:$0xff] 0.0
          %777 = vst [vmem:[%s724 + $0xe8] sm:$0xff] 0.0
          %778 = vst [vmem:[%s724 + $0xf0] sm:$0xff] 0.0
          %779 = vst [vmem:[%s724 + $0xf8] sm:$0xff] 0.0
          %780 = vst [vmem:[%s724 + $0x100] sm:$0xff] 0.0
          %781 = vst [vmem:[%s724 + $0x108] sm:$0xff] 0.0
          %782 = vst [vmem:[%s724 + $0x110] sm:$0xff] 0.0
          %783 = vst [vmem:[%s724 + $0x118] sm:$0xff] 0.0
          %784 = vst [vmem:[%s724 + $0x120] sm:$0xff] 0.0
          %785 = vst [vmem:[%s724 + $0x128] sm:$0xff] 0.0
          %786 = vst [vmem:[%s724 + $0x130] sm:$0xff] 0.0
          %787 = vst [vmem:[%s724 + $0x138] sm:$0xff] 0.0
          %788 = vst [vmem:[%s724 + $0x140] sm:$0xff] 0.0
          %789 = vst [vmem:[%s724 + $0x148] sm:$0xff] 0.0
          %790 = vst [vmem:[%s724 + $0x150] sm:$0xff] 0.0
          %791 = vst [vmem:[%s724 + $0x158] sm:$0xff] 0.0
          %792 = vst [vmem:[%s724 + $0x160] sm:$0xff] 0.0
          %793 = vst [vmem:[%s724 + $0x168] sm:$0xff] 0.0
          %794 = vst [vmem:[%s724 + $0x170] sm:$0xff] 0.0
          %795 = vst [vmem:[%s724 + $0x178] sm:$0xff] 0.0
          %796 = vst [vmem:[%s724 + $0x180] sm:$0xff] 0.0
          %797 = vst [vmem:[%s724 + $0x188] sm:$0xff] 0.0
          %798 = vst [vmem:[%s724 + $0x190] sm:$0xff] 0.0
          %799 = vst [vmem:[%s724 + $0x198] sm:$0xff] 0.0
          %800 = vst [vmem:[%s724 + $0x1a0] sm:$0xff] 0.0
          %801 = vst [vmem:[%s724 + $0x1a8] sm:$0xff] 0.0
          %802 = vst [vmem:[%s724 + $0x1b0] sm:$0xff] 0.0
          %803 = vst [vmem:[%s724 + $0x1b8] sm:$0xff] 0.0
          %804 = vst [vmem:[%s724 + $0x1c0] sm:$0xff] 0.0
          %805 = vst [vmem:[%s724 + $0x1c8] sm:$0xff] 0.0
          %806 = vst [vmem:[%s724 + $0x1d0] sm:$0xff] 0.0
          %807 = vst [vmem:[%s724 + $0x1d8] sm:$0xff] 0.0
          %808 = vst [vmem:[%s724 + $0x1e0] sm:$0xff] 0.0
          %809 = vst [vmem:[%s724 + $0x1e8] sm:$0xff] 0.0
          %810 = vst [vmem:[%s724 + $0x1f0] sm:$0xff] 0.0
          %811 = vst [vmem:[%s724 + $0x1f8] sm:$0xff] 0.0
          %812 = vst [vmem:[%s724 + $0x200] sm:$0xff] 0.0
          %813 = vst [vmem:[%s724 + $0x208] sm:$0xff] 0.0
          %814 = vst [vmem:[%s724 + $0x210] sm:$0xff] 0.0
          %815 = vst [vmem:[%s724 + $0x218] sm:$0xff] 0.0
          %816 = vst [vmem:[%s724 + $0x220] sm:$0xff] 0.0
          %817 = vst [vmem:[%s724 + $0x228] sm:$0xff] 0.0
          %818 = vst [vmem:[%s724 + $0x230] sm:$0xff] 0.0
          %819 = vst [vmem:[%s724 + $0x238] sm:$0xff] 0.0
          %820 = vst [vmem:[%s724 + $0x240] sm:$0xff] 0.0
          %821 = vst [vmem:[%s724 + $0x248] sm:$0xff] 0.0
          %822 = vst [vmem:[%s724 + $0x250] sm:$0xff] 0.0
          %823 = vst [vmem:[%s724 + $0x258] sm:$0xff] 0.0
          %824 = vst [vmem:[%s724 + $0x260] sm:$0xff] 0.0
          %825 = vst [vmem:[%s724 + $0x268] sm:$0xff] 0.0
          %826 = vst [vmem:[%s724 + $0x270] sm:$0xff] 0.0
          %827 = vst [vmem:[%s724 + $0x278] sm:$0xff] 0.0
          %828 = vst [vmem:[%s724 + $0x280] sm:$0xff] 0.0
          %829 = vst [vmem:[%s724 + $0x288] sm:$0xff] 0.0
          %830 = vst [vmem:[%s724 + $0x290] sm:$0xff] 0.0
          %831 = vst [vmem:[%s724 + $0x298] sm:$0xff] 0.0
          %832 = vst [vmem:[%s724 + $0x2a0] sm:$0xff] 0.0
          %833 = vst [vmem:[%s724 + $0x2a8] sm:$0xff] 0.0
          %834 = vst [vmem:[%s724 + $0x2b0] sm:$0xff] 0.0
          %835 = vst [vmem:[%s724 + $0x2b8] sm:$0xff] 0.0
        $region96: #{tpu_custom_call.1} parent=55 // pred_fallthru
          _
        %v836 = vld [vmem:[%s639] sm:$0xff]
        %v837 = vld [vmem:[%s639 + $0x8] sm:$0xff]
        %v838 = vld [vmem:[%s639 + $0x10] sm:$0xff]
        %v839 = vld [vmem:[%s639 + $0x18] sm:$0xff]
        %v840 = vunpack.c.l.bf16 %v836
        %v841 = vunpack.c.h.bf16 %v836
        %v842 = vunpack.c.l.bf16 %v837
        %v843 = vunpack.c.h.bf16 %v837
        %v844 = vunpack.c.l.bf16 %v838
        %v845 = vunpack.c.h.bf16 %v838
        %v846 = vunpack.c.l.bf16 %v839
        %v847 = vunpack.c.h.bf16 %v839
        %v848 = vld [vmem:[%s649] sm:$0xff]
        %v849 = vld [vmem:[%s649 + $0x8] sm:$0xff]
        %v850 = vld [vmem:[%s649 + $0x10] sm:$0xff]
        %v851 = vld [vmem:[%s649 + $0x18] sm:$0xff]
        %v852 = vunpack.c.l.bf16 %v848
        %v853 = vunpack.c.h.bf16 %v848
        %v854 = vunpack.c.l.bf16 %v849
        %v855 = vunpack.c.h.bf16 %v849
        %v856 = vunpack.c.l.bf16 %v850
        %v857 = vunpack.c.h.bf16 %v850
        %v858 = vunpack.c.l.bf16 %v851
        %v859 = vunpack.c.h.bf16 %v851
        %vm860 = vcmp.gt.f32.partialorder %v840, 0.5
        %vm861 = vcmp.gt.f32.partialorder %v841, 0.5
        %vm862 = vcmp.gt.f32.partialorder %v842, 0.5
        %vm863 = vcmp.gt.f32.partialorder %v843, 0.5
        %vm864 = vcmp.gt.f32.partialorder %v844, 0.5
        %vm865 = vcmp.gt.f32.partialorder %v845, 0.5
        %vm866 = vcmp.gt.f32.partialorder %v846, 0.5
        %vm867 = vcmp.gt.f32.partialorder %v847, 0.5
        %v868 = vld [vmem:[%s569] sm:$0xff]
        %v869 = vld [vmem:[%s569 + $0x8] sm:$0xff]
        %v870 = vld [vmem:[%s569 + $0x10] sm:$0xff]
        %v871 = vld [vmem:[%s569 + $0x18] sm:$0xff]
        %v872 = vld [vmem:[%s569 + $0x20] sm:$0xff]
        %v873 = vld [vmem:[%s569 + $0x28] sm:$0xff]
        %v874 = vld [vmem:[%s569 + $0x30] sm:$0xff]
        %v875 = vld [vmem:[%s569 + $0x38] sm:$0xff]
        %v876 = vsub.f32 1.0, %v868
        %v877 = vsub.f32 1.0, %v869
        %v878 = vsub.f32 1.0, %v870
        %v879 = vsub.f32 1.0, %v871
        %v880 = vsub.f32 1.0, %v872
        %v881 = vsub.f32 1.0, %v873
        %v882 = vsub.f32 1.0, %v874
        %v883 = vsub.f32 1.0, %v875
        %v884 = vsel %vm860, %v868, %v876
        %v885 = vsel %vm861, %v869, %v877
        %v886 = vsel %vm862, %v870, %v878
        %v887 = vsel %vm863, %v871, %v879
        %v888 = vsel %vm864, %v872, %v880
        %v889 = vsel %vm865, %v873, %v881
        %v890 = vsel %vm866, %v874, %v882
        %v891 = vsel %vm867, %v875, %v883
        %v892 = vlog2.pop %v884
        %v893 = vmul.f32 %v892, 0.6931472
        %v894 = vlog2.pop %v885
        %v895 = vmul.f32 %v894, 0.6931472
        %v896 = vlog2.pop %v886
        %v897 = vmul.f32 %v896, 0.6931472
        %v898 = vlog2.pop %v887
        %v899 = vmul.f32 %v898, 0.6931472
        %v900 = vlog2.pop %v888
        %v901 = vmul.f32 %v900, 0.6931472
        %v902 = vlog2.pop %v889
        %v903 = vmul.f32 %v902, 0.6931472
        %v904 = vlog2.pop %v890
        %v905 = vmul.f32 %v904, 0.6931472
        %v906 = vlog2.pop %v891
        %v907 = vmul.f32 %v906, 0.6931472
        %v908 = vmax.f32 %v893, -100.0
        %v909 = vmax.f32 %v895, -100.0
        %v910 = vmax.f32 %v897, -100.0
        %v911 = vmax.f32 %v899, -100.0
        %v912 = vmax.f32 %v901, -100.0
        %v913 = vmax.f32 %v903, -100.0
        %v914 = vmax.f32 %v905, -100.0
        %v915 = vmax.f32 %v907, -100.0
        %v916 = vsub.f32 0.0, %v908
        %v917 = vsub.f32 0.0, %v909
        %v918 = vsub.f32 0.0, %v910
        %v919 = vsub.f32 0.0, %v911
        %v920 = vsub.f32 0.0, %v912
        %v921 = vsub.f32 0.0, %v913
        %v922 = vsub.f32 0.0, %v914
        %v923 = vsub.f32 0.0, %v915
        %v924 = vmul.f32 %v916, %v840
        %v925 = vmul.f32 %v917, %v841
        %v926 = vmul.f32 %v918, %v842
        %v927 = vmul.f32 %v919, %v843
        %v928 = vmul.f32 %v920, %v844
        %v929 = vmul.f32 %v921, %v845
        %v930 = vmul.f32 %v922, %v846
        %v931 = vmul.f32 %v923, %v847
        %v932 = vadd.f32 %v924, %v928
        %v933 = vadd.f32 %v925, %v929
        %v934 = vadd.f32 %v926, %v930
        %v935 = vadd.f32 %v927, %v931
        %v936 = vadd.f32 %v916, %v920
        %v937 = vadd.f32 %v917, %v921
        %v938 = vadd.f32 %v918, %v922
        %v939 = vadd.f32 %v919, %v923
        %v940 = vmul.f32 %v868, %v852
        %v941 = vmul.f32 %v869, %v853
        %v942 = vmul.f32 %v870, %v854
        %v943 = vmul.f32 %v871, %v855
        %v944 = vmul.f32 %v872, %v856
        %v945 = vmul.f32 %v873, %v857
        %v946 = vmul.f32 %v874, %v858
        %v947 = vmul.f32 %v875, %v859
        %v948 = vadd.f32 %v940, %v944
        %v949 = vadd.f32 %v941, %v945
        %v950 = vadd.f32 %v942, %v946
        %v951 = vadd.f32 %v943, %v947
        %v952 = vld [vmem:[%s579] sm:$0xff]
        %v953 = vld [vmem:[%s579 + $0x8] sm:$0xff]
        %v954 = vld [vmem:[%s579 + $0x10] sm:$0xff]
        %v955 = vld [vmem:[%s579 + $0x18] sm:$0xff]
        %v956 = vld [vmem:[%s579 + $0x20] sm:$0xff]
        %v957 = vld [vmem:[%s579 + $0x28] sm:$0xff]
        %v958 = vld [vmem:[%s579 + $0x30] sm:$0xff]
        %v959 = vld [vmem:[%s579 + $0x38] sm:$0xff]
        %v960 = vsub.f32 1.0, %v952
        %v961 = vsub.f32 1.0, %v953
        %v962 = vsub.f32 1.0, %v954
        %v963 = vsub.f32 1.0, %v955
        %v964 = vsub.f32 1.0, %v956
        %v965 = vsub.f32 1.0, %v957
        %v966 = vsub.f32 1.0, %v958
        %v967 = vsub.f32 1.0, %v959
        %v968 = vsel %vm860, %v952, %v960
        %v969 = vsel %vm861, %v953, %v961
        %v970 = vsel %vm862, %v954, %v962
        %v971 = vsel %vm863, %v955, %v963
        %v972 = vsel %vm864, %v956, %v964
        %v973 = vsel %vm865, %v957, %v965
        %v974 = vsel %vm866, %v958, %v966
        %v975 = vsel %vm867, %v959, %v967
        %v976 = vlog2.pop %v968
        %v977 = vmul.f32 %v976, 0.6931472
        %v978 = vlog2.pop %v969
        %v979 = vmul.f32 %v978, 0.6931472
        %v980 = vlog2.pop %v970
        %v981 = vmul.f32 %v980, 0.6931472
        %v982 = vlog2.pop %v971
        %v983 = vmul.f32 %v982, 0.6931472
        %v984 = vlog2.pop %v972
        %v985 = vmul.f32 %v984, 0.6931472
        %v986 = vlog2.pop %v973
        %v987 = vmul.f32 %v986, 0.6931472
        %v988 = vlog2.pop %v974
        %v989 = vmul.f32 %v988, 0.6931472
        %v990 = vlog2.pop %v975
        %v991 = vmul.f32 %v990, 0.6931472
        %v992 = vmax.f32 %v977, -100.0
        %v993 = vmax.f32 %v979, -100.0
        %v994 = vmax.f32 %v981, -100.0
        %v995 = vmax.f32 %v983, -100.0
        %v996 = vmax.f32 %v985, -100.0
        %v997 = vmax.f32 %v987, -100.0
        %v998 = vmax.f32 %v989, -100.0
        %v999 = vmax.f32 %v991, -100.0
        %v1000 = vsub.f32 0.0, %v992
        %v1001 = vsub.f32 0.0, %v993
        %v1002 = vsub.f32 0.0, %v994
        %v1003 = vsub.f32 0.0, %v995
        %v1004 = vsub.f32 0.0, %v996
        %v1005 = vsub.f32 0.0, %v997
        %v1006 = vsub.f32 0.0, %v998
        %v1007 = vsub.f32 0.0, %v999
        %v1008 = vmul.f32 %v1000, %v840
        %v1009 = vmul.f32 %v1001, %v841
        %v1010 = vmul.f32 %v1002, %v842
        %v1011 = vmul.f32 %v1003, %v843
        %v1012 = vmul.f32 %v1004, %v844
        %v1013 = vmul.f32 %v1005, %v845
        %v1014 = vmul.f32 %v1006, %v846
        %v1015 = vmul.f32 %v1007, %v847
        %v1016 = vadd.f32 %v1008, %v1012
        %v1017 = vadd.f32 %v1009, %v1013
        %v1018 = vadd.f32 %v1010, %v1014
        %v1019 = vadd.f32 %v1011, %v1015
        %v1020 = vadd.f32 %v1000, %v1004
        %v1021 = vadd.f32 %v1001, %v1005
        %v1022 = vadd.f32 %v1002, %v1006
        %v1023 = vadd.f32 %v1003, %v1007
        %v1024 = vmul.f32 %v952, %v852
        %v1025 = vmul.f32 %v953, %v853
        %v1026 = vmul.f32 %v954, %v854
        %v1027 = vmul.f32 %v955, %v855
        %v1028 = vmul.f32 %v956, %v856
        %v1029 = vmul.f32 %v957, %v857
        %v1030 = vmul.f32 %v958, %v858
        %v1031 = vmul.f32 %v959, %v859
        %v1032 = vadd.f32 %v1024, %v1028
        %v1033 = vadd.f32 %v1025, %v1029
        %v1034 = vadd.f32 %v1026, %v1030
        %v1035 = vadd.f32 %v1027, %v1031
        %v1036 = vld [vmem:[%s589] sm:$0xff]
        %v1037 = vld [vmem:[%s589 + $0x8] sm:$0xff]
        %v1038 = vld [vmem:[%s589 + $0x10] sm:$0xff]
        %v1039 = vld [vmem:[%s589 + $0x18] sm:$0xff]
        %v1040 = vld [vmem:[%s589 + $0x20] sm:$0xff]
        %v1041 = vld [vmem:[%s589 + $0x28] sm:$0xff]
        %v1042 = vld [vmem:[%s589 + $0x30] sm:$0xff]
        %v1043 = vld [vmem:[%s589 + $0x38] sm:$0xff]
        %v1044 = vsub.f32 1.0, %v1036
        %v1045 = vsub.f32 1.0, %v1037
        %v1046 = vsub.f32 1.0, %v1038
        %v1047 = vsub.f32 1.0, %v1039
        %v1048 = vsub.f32 1.0, %v1040
        %v1049 = vsub.f32 1.0, %v1041
        %v1050 = vsub.f32 1.0, %v1042
        %v1051 = vsub.f32 1.0, %v1043
        %v1052 = vsel %vm860, %v1036, %v1044
        %v1053 = vsel %vm861, %v1037, %v1045
        %v1054 = vsel %vm862, %v1038, %v1046
        %v1055 = vsel %vm863, %v1039, %v1047
        %v1056 = vsel %vm864, %v1040, %v1048
        %v1057 = vsel %vm865, %v1041, %v1049
        %v1058 = vsel %vm866, %v1042, %v1050
        %v1059 = vsel %vm867, %v1043, %v1051
        %v1060 = vlog2.pop %v1052
        %v1061 = vmul.f32 %v1060, 0.6931472
        %v1062 = vlog2.pop %v1053
        %v1063 = vmul.f32 %v1062, 0.6931472
        %v1064 = vlog2.pop %v1054
        %v1065 = vmul.f32 %v1064, 0.6931472
        %v1066 = vlog2.pop %v1055
        %v1067 = vmul.f32 %v1066, 0.6931472
        %v1068 = vlog2.pop %v1056
        %v1069 = vmul.f32 %v1068, 0.6931472
        %v1070 = vlog2.pop %v1057
        %v1071 = vmul.f32 %v1070, 0.6931472
        %v1072 = vlog2.pop %v1058
        %v1073 = vmul.f32 %v1072, 0.6931472
        %v1074 = vlog2.pop %v1059
        %v1075 = vmul.f32 %v1074, 0.6931472
        %v1076 = vmax.f32 %v1061, -100.0
        %v1077 = vmax.f32 %v1063, -100.0
        %v1078 = vmax.f32 %v1065, -100.0
        %v1079 = vmax.f32 %v1067, -100.0
        %v1080 = vmax.f32 %v1069, -100.0
        %v1081 = vmax.f32 %v1071, -100.0
        %v1082 = vmax.f32 %v1073, -100.0
        %v1083 = vmax.f32 %v1075, -100.0
        %v1084 = vsub.f32 0.0, %v1076
        %v1085 = vsub.f32 0.0, %v1077
        %v1086 = vsub.f32 0.0, %v1078
        %v1087 = vsub.f32 0.0, %v1079
        %v1088 = vsub.f32 0.0, %v1080
        %v1089 = vsub.f32 0.0, %v1081
        %v1090 = vsub.f32 0.0, %v1082
        %v1091 = vsub.f32 0.0, %v1083
        %v1092 = vmul.f32 %v1084, %v840
        %v1093 = vmul.f32 %v1085, %v841
        %v1094 = vmul.f32 %v1086, %v842
        %v1095 = vmul.f32 %v1087, %v843
        %v1096 = vmul.f32 %v1088, %v844
        %v1097 = vmul.f32 %v1089, %v845
        %v1098 = vmul.f32 %v1090, %v846
        %v1099 = vmul.f32 %v1091, %v847
        %v1100 = vadd.f32 %v1092, %v1096
        %v1101 = vadd.f32 %v1093, %v1097
        %v1102 = vadd.f32 %v1094, %v1098
        %v1103 = vadd.f32 %v1095, %v1099
        %v1104 = vadd.f32 %v1084, %v1088
        %v1105 = vadd.f32 %v1085, %v1089
        %v1106 = vadd.f32 %v1086, %v1090
        %v1107 = vadd.f32 %v1087, %v1091
        %v1108 = vmul.f32 %v1036, %v852
        %v1109 = vmul.f32 %v1037, %v853
        %v1110 = vmul.f32 %v1038, %v854
        %v1111 = vmul.f32 %v1039, %v855
        %v1112 = vmul.f32 %v1040, %v856
        %v1113 = vmul.f32 %v1041, %v857
        %v1114 = vmul.f32 %v1042, %v858
        %v1115 = vmul.f32 %v1043, %v859
        %v1116 = vadd.f32 %v1108, %v1112
        %v1117 = vadd.f32 %v1109, %v1113
        %v1118 = vadd.f32 %v1110, %v1114
        %v1119 = vadd.f32 %v1111, %v1115
        %v1120 = vld [vmem:[%s599] sm:$0xff]
        %v1121 = vld [vmem:[%s599 + $0x8] sm:$0xff]
        %v1122 = vld [vmem:[%s599 + $0x10] sm:$0xff]
        %v1123 = vld [vmem:[%s599 + $0x18] sm:$0xff]
        %v1124 = vld [vmem:[%s599 + $0x20] sm:$0xff]
        %v1125 = vld [vmem:[%s599 + $0x28] sm:$0xff]
        %v1126 = vld [vmem:[%s599 + $0x30] sm:$0xff]
        %v1127 = vld [vmem:[%s599 + $0x38] sm:$0xff]
        %v1128 = vsub.f32 1.0, %v1120
        %v1129 = vsub.f32 1.0, %v1121
        %v1130 = vsub.f32 1.0, %v1122
        %v1131 = vsub.f32 1.0, %v1123
        %v1132 = vsub.f32 1.0, %v1124
        %v1133 = vsub.f32 1.0, %v1125
        %v1134 = vsub.f32 1.0, %v1126
        %v1135 = vsub.f32 1.0, %v1127
        %v1136 = vsel %vm860, %v1120, %v1128
        %v1137 = vsel %vm861, %v1121, %v1129
        %v1138 = vsel %vm862, %v1122, %v1130
        %v1139 = vsel %vm863, %v1123, %v1131
        %v1140 = vsel %vm864, %v1124, %v1132
        %v1141 = vsel %vm865, %v1125, %v1133
        %v1142 = vsel %vm866, %v1126, %v1134
        %v1143 = vsel %vm867, %v1127, %v1135
        %v1144 = vlog2.pop %v1136
        %v1145 = vmul.f32 %v1144, 0.6931472
        %v1146 = vlog2.pop %v1137
        %v1147 = vmul.f32 %v1146, 0.6931472
        %v1148 = vlog2.pop %v1138
        %v1149 = vmul.f32 %v1148, 0.6931472
        %v1150 = vlog2.pop %v1139
        %v1151 = vmul.f32 %v1150, 0.6931472
        %v1152 = vlog2.pop %v1140
        %v1153 = vmul.f32 %v1152, 0.6931472
        %v1154 = vlog2.pop %v1141
        %v1155 = vmul.f32 %v1154, 0.6931472
        %v1156 = vlog2.pop %v1142
        %v1157 = vmul.f32 %v1156, 0.6931472
        %v1158 = vlog2.pop %v1143
        %v1159 = vmul.f32 %v1158, 0.6931472
        %v1160 = vmax.f32 %v1145, -100.0
        %v1161 = vmax.f32 %v1147, -100.0
        %v1162 = vmax.f32 %v1149, -100.0
        %v1163 = vmax.f32 %v1151, -100.0
        %v1164 = vmax.f32 %v1153, -100.0
        %v1165 = vmax.f32 %v1155, -100.0
        %v1166 = vmax.f32 %v1157, -100.0
        %v1167 = vmax.f32 %v1159, -100.0
        %v1168 = vsub.f32 0.0, %v1160
        %v1169 = vsub.f32 0.0, %v1161
        %v1170 = vsub.f32 0.0, %v1162
        %v1171 = vsub.f32 0.0, %v1163
        %v1172 = vsub.f32 0.0, %v1164
        %v1173 = vsub.f32 0.0, %v1165
        %v1174 = vsub.f32 0.0, %v1166
        %v1175 = vsub.f32 0.0, %v1167
        %v1176 = vmul.f32 %v1168, %v840
        %v1177 = vmul.f32 %v1169, %v841
        %v1178 = vmul.f32 %v1170, %v842
        %v1179 = vmul.f32 %v1171, %v843
        %v1180 = vmul.f32 %v1172, %v844
        %v1181 = vmul.f32 %v1173, %v845
        %v1182 = vmul.f32 %v1174, %v846
        %v1183 = vmul.f32 %v1175, %v847
        %v1184 = vadd.f32 %v1176, %v1180
        %v1185 = vadd.f32 %v1177, %v1181
        %v1186 = vadd.f32 %v1178, %v1182
        %v1187 = vadd.f32 %v1179, %v1183
        %v1188 = vadd.f32 %v1168, %v1172
        %v1189 = vadd.f32 %v1169, %v1173
        %v1190 = vadd.f32 %v1170, %v1174
        %v1191 = vadd.f32 %v1171, %v1175
        %v1192 = vmul.f32 %v1120, %v852
        %v1193 = vmul.f32 %v1121, %v853
        %v1194 = vmul.f32 %v1122, %v854
        %v1195 = vmul.f32 %v1123, %v855
        %v1196 = vmul.f32 %v1124, %v856
        %v1197 = vmul.f32 %v1125, %v857
        %v1198 = vmul.f32 %v1126, %v858
        %v1199 = vmul.f32 %v1127, %v859
        %v1200 = vadd.f32 %v1192, %v1196
        %v1201 = vadd.f32 %v1193, %v1197
        %v1202 = vadd.f32 %v1194, %v1198
        %v1203 = vadd.f32 %v1195, %v1199
        %v1204 = vld [vmem:[%s609] sm:$0xff]
        %v1205 = vld [vmem:[%s609 + $0x8] sm:$0xff]
        %v1206 = vld [vmem:[%s609 + $0x10] sm:$0xff]
        %v1207 = vld [vmem:[%s609 + $0x18] sm:$0xff]
        %v1208 = vld [vmem:[%s609 + $0x20] sm:$0xff]
        %v1209 = vld [vmem:[%s609 + $0x28] sm:$0xff]
        %v1210 = vld [vmem:[%s609 + $0x30] sm:$0xff]
        %v1211 = vld [vmem:[%s609 + $0x38] sm:$0xff]
        %v1212 = vsub.f32 1.0, %v1204
        %v1213 = vsub.f32 1.0, %v1205
        %v1214 = vsub.f32 1.0, %v1206
        %v1215 = vsub.f32 1.0, %v1207
        %v1216 = vsub.f32 1.0, %v1208
        %v1217 = vsub.f32 1.0, %v1209
        %v1218 = vsub.f32 1.0, %v1210
        %v1219 = vsub.f32 1.0, %v1211
        %v1220 = vsel %vm860, %v1204, %v1212
        %v1221 = vsel %vm861, %v1205, %v1213
        %v1222 = vsel %vm862, %v1206, %v1214
        %v1223 = vsel %vm863, %v1207, %v1215
        %v1224 = vsel %vm864, %v1208, %v1216
        %v1225 = vsel %vm865, %v1209, %v1217
        %v1226 = vsel %vm866, %v1210, %v1218
        %v1227 = vsel %vm867, %v1211, %v1219
        %v1228 = vlog2.pop %v1220
        %v1229 = vmul.f32 %v1228, 0.6931472
        %v1230 = vlog2.pop %v1221
        %v1231 = vmul.f32 %v1230, 0.6931472
        %v1232 = vlog2.pop %v1222
        %v1233 = vmul.f32 %v1232, 0.6931472
        %v1234 = vlog2.pop %v1223
        %v1235 = vmul.f32 %v1234, 0.6931472
        %v1236 = vlog2.pop %v1224
        %v1237 = vmul.f32 %v1236, 0.6931472
        %v1238 = vlog2.pop %v1225
        %v1239 = vmul.f32 %v1238, 0.6931472
        %v1240 = vlog2.pop %v1226
        %v1241 = vmul.f32 %v1240, 0.6931472
        %v1242 = vlog2.pop %v1227
        %v1243 = vmul.f32 %v1242, 0.6931472
        %v1244 = vmax.f32 %v1229, -100.0
        %v1245 = vmax.f32 %v1231, -100.0
        %v1246 = vmax.f32 %v1233, -100.0
        %v1247 = vmax.f32 %v1235, -100.0
        %v1248 = vmax.f32 %v1237, -100.0
        %v1249 = vmax.f32 %v1239, -100.0
        %v1250 = vmax.f32 %v1241, -100.0
        %v1251 = vmax.f32 %v1243, -100.0
        %v1252 = vsub.f32 0.0, %v1244
        %v1253 = vsub.f32 0.0, %v1245
        %v1254 = vsub.f32 0.0, %v1246
        %v1255 = vsub.f32 0.0, %v1247
        %v1256 = vsub.f32 0.0, %v1248
        %v1257 = vsub.f32 0.0, %v1249
        %v1258 = vsub.f32 0.0, %v1250
        %v1259 = vsub.f32 0.0, %v1251
        %v1260 = vmul.f32 %v1252, %v840
        %v1261 = vmul.f32 %v1253, %v841
        %v1262 = vmul.f32 %v1254, %v842
        %v1263 = vmul.f32 %v1255, %v843
        %v1264 = vmul.f32 %v1256, %v844
        %v1265 = vmul.f32 %v1257, %v845
        %v1266 = vmul.f32 %v1258, %v846
        %v1267 = vmul.f32 %v1259, %v847
        %v1268 = vadd.f32 %v1260, %v1264
        %v1269 = vadd.f32 %v1261, %v1265
        %v1270 = vadd.f32 %v1262, %v1266
        %v1271 = vadd.f32 %v1263, %v1267
        %v1272 = vadd.f32 %v1252, %v1256
        %v1273 = vadd.f32 %v1253, %v1257
        %v1274 = vadd.f32 %v1254, %v1258
        %v1275 = vadd.f32 %v1255, %v1259
        %v1276 = vmul.f32 %v1204, %v852
        %v1277 = vmul.f32 %v1205, %v853
        %v1278 = vmul.f32 %v1206, %v854
        %v1279 = vmul.f32 %v1207, %v855
        %v1280 = vmul.f32 %v1208, %v856
        %v1281 = vmul.f32 %v1209, %v857
        %v1282 = vmul.f32 %v1210, %v858
        %v1283 = vmul.f32 %v1211, %v859
        %v1284 = vadd.f32 %v1276, %v1280
        %v1285 = vadd.f32 %v1277, %v1281
        %v1286 = vadd.f32 %v1278, %v1282
        %v1287 = vadd.f32 %v1279, %v1283
        %v1288 = vld [vmem:[%s619] sm:$0xff]
        %v1289 = vld [vmem:[%s619 + $0x8] sm:$0xff]
        %v1290 = vld [vmem:[%s619 + $0x10] sm:$0xff]
        %v1291 = vld [vmem:[%s619 + $0x18] sm:$0xff]
        %v1292 = vld [vmem:[%s619 + $0x20] sm:$0xff]
        %v1293 = vld [vmem:[%s619 + $0x28] sm:$0xff]
        %v1294 = vld [vmem:[%s619 + $0x30] sm:$0xff]
        %v1295 = vld [vmem:[%s619 + $0x38] sm:$0xff]
        %v1296 = vsub.f32 1.0, %v1288
        %v1297 = vsub.f32 1.0, %v1289
        %v1298 = vsub.f32 1.0, %v1290
        %v1299 = vsub.f32 1.0, %v1291
        %v1300 = vsub.f32 1.0, %v1292
        %v1301 = vsub.f32 1.0, %v1293
        %v1302 = vsub.f32 1.0, %v1294
        %v1303 = vsub.f32 1.0, %v1295
        %v1304 = vsel %vm860, %v1288, %v1296
        %v1305 = vsel %vm861, %v1289, %v1297
        %v1306 = vsel %vm862, %v1290, %v1298
        %v1307 = vsel %vm863, %v1291, %v1299
        %v1308 = vsel %vm864, %v1292, %v1300
        %v1309 = vsel %vm865, %v1293, %v1301
        %v1310 = vsel %vm866, %v1294, %v1302
        %v1311 = vsel %vm867, %v1295, %v1303
        %v1312 = vlog2.pop %v1304
        %v1313 = vmul.f32 %v1312, 0.6931472
        %v1314 = vlog2.pop %v1305
        %v1315 = vmul.f32 %v1314, 0.6931472
        %v1316 = vlog2.pop %v1306
        %v1317 = vmul.f32 %v1316, 0.6931472
        %v1318 = vlog2.pop %v1307
        %v1319 = vmul.f32 %v1318, 0.6931472
        %v1320 = vlog2.pop %v1308
        %v1321 = vmul.f32 %v1320, 0.6931472
        %v1322 = vlog2.pop %v1309
        %v1323 = vmul.f32 %v1322, 0.6931472
        %v1324 = vlog2.pop %v1310
        %v1325 = vmul.f32 %v1324, 0.6931472
        %v1326 = vlog2.pop %v1311
        %v1327 = vmul.f32 %v1326, 0.6931472
        %v1328 = vmax.f32 %v1313, -100.0
        %v1329 = vmax.f32 %v1315, -100.0
        %v1330 = vmax.f32 %v1317, -100.0
        %v1331 = vmax.f32 %v1319, -100.0
        %v1332 = vmax.f32 %v1321, -100.0
        %v1333 = vmax.f32 %v1323, -100.0
        %v1334 = vmax.f32 %v1325, -100.0
        %v1335 = vmax.f32 %v1327, -100.0
        %v1336 = vsub.f32 0.0, %v1328
        %v1337 = vsub.f32 0.0, %v1329
        %v1338 = vsub.f32 0.0, %v1330
        %v1339 = vsub.f32 0.0, %v1331
        %v1340 = vsub.f32 0.0, %v1332
        %v1341 = vsub.f32 0.0, %v1333
        %v1342 = vsub.f32 0.0, %v1334
        %v1343 = vsub.f32 0.0, %v1335
        %v1344 = vmul.f32 %v1336, %v840
        %v1345 = vmul.f32 %v1337, %v841
        %v1346 = vmul.f32 %v1338, %v842
        %v1347 = vmul.f32 %v1339, %v843
        %v1348 = vmul.f32 %v1340, %v844
        %v1349 = vmul.f32 %v1341, %v845
        %v1350 = vmul.f32 %v1342, %v846
        %v1351 = vmul.f32 %v1343, %v847
        %v1352 = vadd.f32 %v1344, %v1348
        %v1353 = vadd.f32 %v1345, %v1349
        %v1354 = vadd.f32 %v1346, %v1350
        %v1355 = vadd.f32 %v1347, %v1351
        %v1356 = vadd.f32 %v1336, %v1340
        %v1357 = vadd.f32 %v1337, %v1341
        %v1358 = vadd.f32 %v1338, %v1342
        %v1359 = vadd.f32 %v1339, %v1343
        %v1360 = vmul.f32 %v1288, %v852
        %v1361 = vmul.f32 %v1289, %v853
        %v1362 = vmul.f32 %v1290, %v854
        %v1363 = vmul.f32 %v1291, %v855
        %v1364 = vmul.f32 %v1292, %v856
        %v1365 = vmul.f32 %v1293, %v857
        %v1366 = vmul.f32 %v1294, %v858
        %v1367 = vmul.f32 %v1295, %v859
        %v1368 = vadd.f32 %v1360, %v1364
        %v1369 = vadd.f32 %v1361, %v1365
        %v1370 = vadd.f32 %v1362, %v1366
        %v1371 = vadd.f32 %v1363, %v1367
        %v1372 = vld [vmem:[%s629] sm:$0xff]
        %v1373 = vld [vmem:[%s629 + $0x8] sm:$0xff]
        %v1374 = vld [vmem:[%s629 + $0x10] sm:$0xff]
        %v1375 = vld [vmem:[%s629 + $0x18] sm:$0xff]
        %v1376 = vld [vmem:[%s629 + $0x20] sm:$0xff]
        %v1377 = vld [vmem:[%s629 + $0x28] sm:$0xff]
        %v1378 = vld [vmem:[%s629 + $0x30] sm:$0xff]
        %v1379 = vld [vmem:[%s629 + $0x38] sm:$0xff]
        %v1380 = vsub.f32 1.0, %v1372
        %v1381 = vsub.f32 1.0, %v1373
        %v1382 = vsub.f32 1.0, %v1374
        %v1383 = vsub.f32 1.0, %v1375
        %v1384 = vsub.f32 1.0, %v1376
        %v1385 = vsub.f32 1.0, %v1377
        %v1386 = vsub.f32 1.0, %v1378
        %v1387 = vsub.f32 1.0, %v1379
        %v1388 = vsel %vm860, %v1372, %v1380
        %v1389 = vsel %vm861, %v1373, %v1381
        %v1390 = vsel %vm862, %v1374, %v1382
        %v1391 = vsel %vm863, %v1375, %v1383
        %v1392 = vsel %vm864, %v1376, %v1384
        %v1393 = vsel %vm865, %v1377, %v1385
        %v1394 = vsel %vm866, %v1378, %v1386
        %v1395 = vsel %vm867, %v1379, %v1387
        %v1396 = vlog2.pop %v1388
        %v1397 = vmul.f32 %v1396, 0.6931472
        %v1398 = vlog2.pop %v1389
        %v1399 = vmul.f32 %v1398, 0.6931472
        %v1400 = vlog2.pop %v1390
        %v1401 = vmul.f32 %v1400, 0.6931472
        %v1402 = vlog2.pop %v1391
        %v1403 = vmul.f32 %v1402, 0.6931472
        %v1404 = vlog2.pop %v1392
        %v1405 = vmul.f32 %v1404, 0.6931472
        %v1406 = vlog2.pop %v1393
        %v1407 = vmul.f32 %v1406, 0.6931472
        %v1408 = vlog2.pop %v1394
        %v1409 = vmul.f32 %v1408, 0.6931472
        %v1410 = vlog2.pop %v1395
        %v1411 = vmul.f32 %v1410, 0.6931472
        %v1412 = vmax.f32 %v1397, -100.0
        %v1413 = vmax.f32 %v1399, -100.0
        %v1414 = vmax.f32 %v1401, -100.0
        %v1415 = vmax.f32 %v1403, -100.0
        %v1416 = vmax.f32 %v1405, -100.0
        %v1417 = vmax.f32 %v1407, -100.0
        %v1418 = vmax.f32 %v1409, -100.0
        %v1419 = vmax.f32 %v1411, -100.0
        %v1420 = vsub.f32 0.0, %v1412
        %v1421 = vsub.f32 0.0, %v1413
        %v1422 = vsub.f32 0.0, %v1414
        %v1423 = vsub.f32 0.0, %v1415
        %v1424 = vsub.f32 0.0, %v1416
        %v1425 = vsub.f32 0.0, %v1417
        %v1426 = vsub.f32 0.0, %v1418
        %v1427 = vsub.f32 0.0, %v1419
        %v1428 = vmul.f32 %v1420, %v840
        %v1429 = vmul.f32 %v1421, %v841
        %v1430 = vmul.f32 %v1422, %v842
        %v1431 = vmul.f32 %v1423, %v843
        %v1432 = vmul.f32 %v1424, %v844
        %v1433 = vmul.f32 %v1425, %v845
        %v1434 = vmul.f32 %v1426, %v846
        %v1435 = vmul.f32 %v1427, %v847
        %v1436 = vadd.f32 %v1428, %v1432
        %v1437 = vadd.f32 %v1429, %v1433
        %v1438 = vadd.f32 %v1430, %v1434
        %v1439 = vadd.f32 %v1431, %v1435
        %v1440 = vadd.f32 %v1420, %v1424
        %v1441 = vadd.f32 %v1421, %v1425
        %v1442 = vadd.f32 %v1422, %v1426
        %v1443 = vadd.f32 %v1423, %v1427
        %v1444 = vmul.f32 %v1372, %v852
        %v1445 = vmul.f32 %v1373, %v853
        %v1446 = vmul.f32 %v1374, %v854
        %v1447 = vmul.f32 %v1375, %v855
        %v1448 = vmul.f32 %v1376, %v856
        %v1449 = vmul.f32 %v1377, %v857
        %v1450 = vmul.f32 %v1378, %v858
        %v1451 = vmul.f32 %v1379, %v859
        %v1452 = vadd.f32 %v1444, %v1448
        %v1453 = vadd.f32 %v1445, %v1449
        %v1454 = vadd.f32 %v1446, %v1450
        %v1455 = vadd.f32 %v1447, %v1451
        %v1456 = vadd.f32 %v840, %v844
        %v1457 = vadd.f32 %v841, %v845
        %v1458 = vadd.f32 %v842, %v846
        %v1459 = vadd.f32 %v843, %v847
        %v1460 = vld [vmem:[%s724] sm:$0xff]
        %v1461 = vld [vmem:[%s724 + $0x8] sm:$0xff]
        %v1462 = vld [vmem:[%s724 + $0x10] sm:$0xff]
        %v1463 = vld [vmem:[%s724 + $0x18] sm:$0xff]
        %v1464 = vld [vmem:[%s724 + $0x20] sm:$0xff]
        %v1465 = vld [vmem:[%s724 + $0x28] sm:$0xff]
        %v1466 = vld [vmem:[%s724 + $0x30] sm:$0xff]
        %v1467 = vld [vmem:[%s724 + $0x38] sm:$0xff]
        %v1468 = vld [vmem:[%s724 + $0x40] sm:$0xff]
        %v1469 = vld [vmem:[%s724 + $0x48] sm:$0xff]
        %v1470 = vld [vmem:[%s724 + $0x50] sm:$0xff]
        %v1471 = vld [vmem:[%s724 + $0x58] sm:$0xff]
        %v1472 = vld [vmem:[%s724 + $0x60] sm:$0xff]
        %v1473 = vld [vmem:[%s724 + $0x68] sm:$0xff]
        %v1474 = vld [vmem:[%s724 + $0x70] sm:$0xff]
        %v1475 = vld [vmem:[%s724 + $0x78] sm:$0xff]
        %v1476 = vld [vmem:[%s724 + $0x80] sm:$0xff]
        %v1477 = vld [vmem:[%s724 + $0x88] sm:$0xff]
        %v1478 = vld [vmem:[%s724 + $0x90] sm:$0xff]
        %v1479 = vld [vmem:[%s724 + $0x98] sm:$0xff]
        %v1480 = vld [vmem:[%s724 + $0xa0] sm:$0xff]
        %v1481 = vld [vmem:[%s724 + $0xa8] sm:$0xff]
        %v1482 = vld [vmem:[%s724 + $0xb0] sm:$0xff]
        %v1483 = vld [vmem:[%s724 + $0xb8] sm:$0xff]
        %v1484 = vld [vmem:[%s724 + $0xc0] sm:$0xff]
        %v1485 = vld [vmem:[%s724 + $0xc8] sm:$0xff]
        %v1486 = vld [vmem:[%s724 + $0xd0] sm:$0xff]
        %v1487 = vld [vmem:[%s724 + $0xd8] sm:$0xff]
        %v1488 = vld [vmem:[%s724 + $0xe0] sm:$0xff]
        %v1489 = vld [vmem:[%s724 + $0xe8] sm:$0xff]
        %v1490 = vld [vmem:[%s724 + $0xf0] sm:$0xff]
        %v1491 = vld [vmem:[%s724 + $0xf8] sm:$0xff]
        %v1492 = vld [vmem:[%s724 + $0x100] sm:$0xff]
        %v1493 = vld [vmem:[%s724 + $0x108] sm:$0xff]
        %v1494 = vld [vmem:[%s724 + $0x110] sm:$0xff]
        %v1495 = vld [vmem:[%s724 + $0x118] sm:$0xff]
        %v1496 = vld [vmem:[%s724 + $0x120] sm:$0xff]
        %v1497 = vld [vmem:[%s724 + $0x128] sm:$0xff]
        %v1498 = vld [vmem:[%s724 + $0x130] sm:$0xff]
        %v1499 = vld [vmem:[%s724 + $0x138] sm:$0xff]
        %v1500 = vld [vmem:[%s724 + $0x140] sm:$0xff]
        %v1501 = vld [vmem:[%s724 + $0x148] sm:$0xff]
        %v1502 = vld [vmem:[%s724 + $0x150] sm:$0xff]
        %v1503 = vld [vmem:[%s724 + $0x158] sm:$0xff]
        %v1504 = vld [vmem:[%s724 + $0x160] sm:$0xff]
        %v1505 = vld [vmem:[%s724 + $0x168] sm:$0xff]
        %v1506 = vld [vmem:[%s724 + $0x170] sm:$0xff]
        %v1507 = vld [vmem:[%s724 + $0x178] sm:$0xff]
        %v1508 = vld [vmem:[%s724 + $0x180] sm:$0xff]
        %v1509 = vld [vmem:[%s724 + $0x188] sm:$0xff]
        %v1510 = vld [vmem:[%s724 + $0x190] sm:$0xff]
        %v1511 = vld [vmem:[%s724 + $0x198] sm:$0xff]
        %v1512 = vld [vmem:[%s724 + $0x1a0] sm:$0xff]
        %v1513 = vld [vmem:[%s724 + $0x1a8] sm:$0xff]
        %v1514 = vld [vmem:[%s724 + $0x1b0] sm:$0xff]
        %v1515 = vld [vmem:[%s724 + $0x1b8] sm:$0xff]
        %v1516 = vld [vmem:[%s724 + $0x1c0] sm:$0xff]
        %v1517 = vld [vmem:[%s724 + $0x1c8] sm:$0xff]
        %v1518 = vld [vmem:[%s724 + $0x1d0] sm:$0xff]
        %v1519 = vld [vmem:[%s724 + $0x1d8] sm:$0xff]
        %v1520 = vld [vmem:[%s724 + $0x1e0] sm:$0xff]
        %v1521 = vld [vmem:[%s724 + $0x1e8] sm:$0xff]
        %v1522 = vld [vmem:[%s724 + $0x1f0] sm:$0xff]
        %v1523 = vld [vmem:[%s724 + $0x1f8] sm:$0xff]
        %v1524 = vld [vmem:[%s724 + $0x200] sm:$0xff]
        %v1525 = vld [vmem:[%s724 + $0x208] sm:$0xff]
        %v1526 = vld [vmem:[%s724 + $0x210] sm:$0xff]
        %v1527 = vld [vmem:[%s724 + $0x218] sm:$0xff]
        %v1528 = vld [vmem:[%s724 + $0x220] sm:$0xff]
        %v1529 = vld [vmem:[%s724 + $0x228] sm:$0xff]
        %v1530 = vld [vmem:[%s724 + $0x230] sm:$0xff]
        %v1531 = vld [vmem:[%s724 + $0x238] sm:$0xff]
        %v1532 = vld [vmem:[%s724 + $0x240] sm:$0xff]
        %v1533 = vld [vmem:[%s724 + $0x248] sm:$0xff]
        %v1534 = vld [vmem:[%s724 + $0x250] sm:$0xff]
        %v1535 = vld [vmem:[%s724 + $0x258] sm:$0xff]
        %v1536 = vld [vmem:[%s724 + $0x260] sm:$0xff]
        %v1537 = vld [vmem:[%s724 + $0x268] sm:$0xff]
        %v1538 = vld [vmem:[%s724 + $0x270] sm:$0xff]
        %v1539 = vld [vmem:[%s724 + $0x278] sm:$0xff]
        %v1540 = vld [vmem:[%s724 + $0x280] sm:$0xff]
        %v1541 = vld [vmem:[%s724 + $0x288] sm:$0xff]
        %v1542 = vld [vmem:[%s724 + $0x290] sm:$0xff]
        %v1543 = vld [vmem:[%s724 + $0x298] sm:$0xff]
        %v1544 = vld [vmem:[%s724 + $0x2a0] sm:$0xff]
        %v1545 = vld [vmem:[%s724 + $0x2a8] sm:$0xff]
        %v1546 = vld [vmem:[%s724 + $0x2b0] sm:$0xff]
        %v1547 = vld [vmem:[%s724 + $0x2b8] sm:$0xff]
        %v1548 = vadd.f32 %v1460, %v932
        %v1549 = vadd.f32 %v1461, %v933
        %v1550 = vadd.f32 %v1462, %v934
        %v1551 = vadd.f32 %v1463, %v935
        %v1552 = vadd.f32 %v1464, %v1016
        %v1553 = vadd.f32 %v1465, %v1017
        %v1554 = vadd.f32 %v1466, %v1018
        %v1555 = vadd.f32 %v1467, %v1019
        %v1556 = vadd.f32 %v1468, %v1100
        %v1557 = vadd.f32 %v1469, %v1101
        %v1558 = vadd.f32 %v1470, %v1102
        %v1559 = vadd.f32 %v1471, %v1103
        %v1560 = vadd.f32 %v1472, %v1184
        %v1561 = vadd.f32 %v1473, %v1185
        %v1562 = vadd.f32 %v1474, %v1186
        %v1563 = vadd.f32 %v1475, %v1187
        %v1564 = vadd.f32 %v1476, %v1268
        %v1565 = vadd.f32 %v1477, %v1269
        %v1566 = vadd.f32 %v1478, %v1270
        %v1567 = vadd.f32 %v1479, %v1271
        %v1568 = vadd.f32 %v1480, %v1352
        %v1569 = vadd.f32 %v1481, %v1353
        %v1570 = vadd.f32 %v1482, %v1354
        %v1571 = vadd.f32 %v1483, %v1355
        %v1572 = vadd.f32 %v1484, %v1436
        %v1573 = vadd.f32 %v1485, %v1437
        %v1574 = vadd.f32 %v1486, %v1438
        %v1575 = vadd.f32 %v1487, %v1439
        %v1576 = vadd.f32 %v1488, %v936
        %v1577 = vadd.f32 %v1489, %v937
        %v1578 = vadd.f32 %v1490, %v938
        %v1579 = vadd.f32 %v1491, %v939
        %v1580 = vadd.f32 %v1492, %v1020
        %v1581 = vadd.f32 %v1493, %v1021
        %v1582 = vadd.f32 %v1494, %v1022
        %v1583 = vadd.f32 %v1495, %v1023
        %v1584 = vadd.f32 %v1496, %v1104
        %v1585 = vadd.f32 %v1497, %v1105
        %v1586 = vadd.f32 %v1498, %v1106
        %v1587 = vadd.f32 %v1499, %v1107
        %v1588 = vadd.f32 %v1500, %v1188
        %v1589 = vadd.f32 %v1501, %v1189
        %v1590 = vadd.f32 %v1502, %v1190
        %v1591 = vadd.f32 %v1503, %v1191
        %v1592 = vadd.f32 %v1504, %v1272
        %v1593 = vadd.f32 %v1505, %v1273
        %v1594 = vadd.f32 %v1506, %v1274
        %v1595 = vadd.f32 %v1507, %v1275
        %v1596 = vadd.f32 %v1508, %v1356
        %v1597 = vadd.f32 %v1509, %v1357
        %v1598 = vadd.f32 %v1510, %v1358
        %v1599 = vadd.f32 %v1511, %v1359
        %v1600 = vadd.f32 %v1512, %v1440
        %v1601 = vadd.f32 %v1513, %v1441
        %v1602 = vadd.f32 %v1514, %v1442
        %v1603 = vadd.f32 %v1515, %v1443
        %v1604 = vadd.f32 %v1516, %v948
        %v1605 = vadd.f32 %v1517, %v949
        %v1606 = vadd.f32 %v1518, %v950
        %v1607 = vadd.f32 %v1519, %v951
        %v1608 = vadd.f32 %v1520, %v1032
        %v1609 = vadd.f32 %v1521, %v1033
        %v1610 = vadd.f32 %v1522, %v1034
        %v1611 = vadd.f32 %v1523, %v1035
        %v1612 = vadd.f32 %v1524, %v1116
        %v1613 = vadd.f32 %v1525, %v1117
        %v1614 = vadd.f32 %v1526, %v1118
        %v1615 = vadd.f32 %v1527, %v1119
        %v1616 = vadd.f32 %v1528, %v1200
        %v1617 = vadd.f32 %v1529, %v1201
        %v1618 = vadd.f32 %v1530, %v1202
        %v1619 = vadd.f32 %v1531, %v1203
        %v1620 = vadd.f32 %v1532, %v1284
        %v1621 = vadd.f32 %v1533, %v1285
        %v1622 = vadd.f32 %v1534, %v1286
        %v1623 = vadd.f32 %v1535, %v1287
        %v1624 = vadd.f32 %v1536, %v1368
        %v1625 = vadd.f32 %v1537, %v1369
        %v1626 = vadd.f32 %v1538, %v1370
        %v1627 = vadd.f32 %v1539, %v1371
        %v1628 = vadd.f32 %v1540, %v1452
        %v1629 = vadd.f32 %v1541, %v1453
        %v1630 = vadd.f32 %v1542, %v1454
        %v1631 = vadd.f32 %v1543, %v1455
        %v1632 = vadd.f32 %v1544, %v1456
        %v1633 = vadd.f32 %v1545, %v1457
        %v1634 = vadd.f32 %v1546, %v1458
        %v1635 = vadd.f32 %v1547, %v1459
        %1636 = vst [vmem:[%s724] sm:$0xff] %v1548
        %1637 = vst [vmem:[%s724 + $0x8] sm:$0xff] %v1549
        %1638 = vst [vmem:[%s724 + $0x10] sm:$0xff] %v1550
        %1639 = vst [vmem:[%s724 + $0x18] sm:$0xff] %v1551
        %1640 = vst [vmem:[%s724 + $0x20] sm:$0xff] %v1552
        %1641 = vst [vmem:[%s724 + $0x28] sm:$0xff] %v1553
        %1642 = vst [vmem:[%s724 + $0x30] sm:$0xff] %v1554
        %1643 = vst [vmem:[%s724 + $0x38] sm:$0xff] %v1555
        %1644 = vst [vmem:[%s724 + $0x40] sm:$0xff] %v1556
        %1645 = vst [vmem:[%s724 + $0x48] sm:$0xff] %v1557
        %1646 = vst [vmem:[%s724 + $0x50] sm:$0xff] %v1558
        %1647 = vst [vmem:[%s724 + $0x58] sm:$0xff] %v1559
        %1648 = vst [vmem:[%s724 + $0x60] sm:$0xff] %v1560
        %1649 = vst [vmem:[%s724 + $0x68] sm:$0xff] %v1561
        %1650 = vst [vmem:[%s724 + $0x70] sm:$0xff] %v1562
        %1651 = vst [vmem:[%s724 + $0x78] sm:$0xff] %v1563
        %1652 = vst [vmem:[%s724 + $0x80] sm:$0xff] %v1564
        %1653 = vst [vmem:[%s724 + $0x88] sm:$0xff] %v1565
        %1654 = vst [vmem:[%s724 + $0x90] sm:$0xff] %v1566
        %1655 = vst [vmem:[%s724 + $0x98] sm:$0xff] %v1567
        %1656 = vst [vmem:[%s724 + $0xa0] sm:$0xff] %v1568
        %1657 = vst [vmem:[%s724 + $0xa8] sm:$0xff] %v1569
        %1658 = vst [vmem:[%s724 + $0xb0] sm:$0xff] %v1570
        %1659 = vst [vmem:[%s724 + $0xb8] sm:$0xff] %v1571
        %1660 = vst [vmem:[%s724 + $0xc0] sm:$0xff] %v1572
        %1661 = vst [vmem:[%s724 + $0xc8] sm:$0xff] %v1573
        %1662 = vst [vmem:[%s724 + $0xd0] sm:$0xff] %v1574
        %1663 = vst [vmem:[%s724 + $0xd8] sm:$0xff] %v1575
        %1664 = vst [vmem:[%s724 + $0xe0] sm:$0xff] %v1576
        %1665 = vst [vmem:[%s724 + $0xe8] sm:$0xff] %v1577
        %1666 = vst [vmem:[%s724 + $0xf0] sm:$0xff] %v1578
        %1667 = vst [vmem:[%s724 + $0xf8] sm:$0xff] %v1579
        %1668 = vst [vmem:[%s724 + $0x100] sm:$0xff] %v1580
        %1669 = vst [vmem:[%s724 + $0x108] sm:$0xff] %v1581
        %1670 = vst [vmem:[%s724 + $0x110] sm:$0xff] %v1582
        %1671 = vst [vmem:[%s724 + $0x118] sm:$0xff] %v1583
        %1672 = vst [vmem:[%s724 + $0x120] sm:$0xff] %v1584
        %1673 = vst [vmem:[%s724 + $0x128] sm:$0xff] %v1585
        %1674 = vst [vmem:[%s724 + $0x130] sm:$0xff] %v1586
        %1675 = vst [vmem:[%s724 + $0x138] sm:$0xff] %v1587
        %1676 = vst [vmem:[%s724 + $0x140] sm:$0xff] %v1588
        %1677 = vst [vmem:[%s724 + $0x148] sm:$0xff] %v1589
        %1678 = vst [vmem:[%s724 + $0x150] sm:$0xff] %v1590
        %1679 = vst [vmem:[%s724 + $0x158] sm:$0xff] %v1591
        %1680 = vst [vmem:[%s724 + $0x160] sm:$0xff] %v1592
        %1681 = vst [vmem:[%s724 + $0x168] sm:$0xff] %v1593
        %1682 = vst [vmem:[%s724 + $0x170] sm:$0xff] %v1594
        %1683 = vst [vmem:[%s724 + $0x178] sm:$0xff] %v1595
        %1684 = vst [vmem:[%s724 + $0x180] sm:$0xff] %v1596
        %1685 = vst [vmem:[%s724 + $0x188] sm:$0xff] %v1597
        %1686 = vst [vmem:[%s724 + $0x190] sm:$0xff] %v1598
        %1687 = vst [vmem:[%s724 + $0x198] sm:$0xff] %v1599
        %1688 = vst [vmem:[%s724 + $0x1a0] sm:$0xff] %v1600
        %1689 = vst [vmem:[%s724 + $0x1a8] sm:$0xff] %v1601
        %1690 = vst [vmem:[%s724 + $0x1b0] sm:$0xff] %v1602
        %1691 = vst [vmem:[%s724 + $0x1b8] sm:$0xff] %v1603
        %1692 = vst [vmem:[%s724 + $0x1c0] sm:$0xff] %v1604
        %1693 = vst [vmem:[%s724 + $0x1c8] sm:$0xff] %v1605
        %1694 = vst [vmem:[%s724 + $0x1d0] sm:$0xff] %v1606
        %1695 = vst [vmem:[%s724 + $0x1d8] sm:$0xff] %v1607
        %1696 = vst [vmem:[%s724 + $0x1e0] sm:$0xff] %v1608
        %1697 = vst [vmem:[%s724 + $0x1e8] sm:$0xff] %v1609
        %1698 = vst [vmem:[%s724 + $0x1f0] sm:$0xff] %v1610
        %1699 = vst [vmem:[%s724 + $0x1f8] sm:$0xff] %v1611
        %1700 = vst [vmem:[%s724 + $0x200] sm:$0xff] %v1612
        %1701 = vst [vmem:[%s724 + $0x208] sm:$0xff] %v1613
        %1702 = vst [vmem:[%s724 + $0x210] sm:$0xff] %v1614
        %1703 = vst [vmem:[%s724 + $0x218] sm:$0xff] %v1615
        %1704 = vst [vmem:[%s724 + $0x220] sm:$0xff] %v1616
        %1705 = vst [vmem:[%s724 + $0x228] sm:$0xff] %v1617
        %1706 = vst [vmem:[%s724 + $0x230] sm:$0xff] %v1618
        %1707 = vst [vmem:[%s724 + $0x238] sm:$0xff] %v1619
        %1708 = vst [vmem:[%s724 + $0x240] sm:$0xff] %v1620
        %1709 = vst [vmem:[%s724 + $0x248] sm:$0xff] %v1621
        %1710 = vst [vmem:[%s724 + $0x250] sm:$0xff] %v1622
        %1711 = vst [vmem:[%s724 + $0x258] sm:$0xff] %v1623
        %1712 = vst [vmem:[%s724 + $0x260] sm:$0xff] %v1624
        %1713 = vst [vmem:[%s724 + $0x268] sm:$0xff] %v1625
        %1714 = vst [vmem:[%s724 + $0x270] sm:$0xff] %v1626
        %1715 = vst [vmem:[%s724 + $0x278] sm:$0xff] %v1627
        %1716 = vst [vmem:[%s724 + $0x280] sm:$0xff] %v1628
        %1717 = vst [vmem:[%s724 + $0x288] sm:$0xff] %v1629
        %1718 = vst [vmem:[%s724 + $0x290] sm:$0xff] %v1630
        %1719 = vst [vmem:[%s724 + $0x298] sm:$0xff] %v1631
        %1720 = vst [vmem:[%s724 + $0x2a0] sm:$0xff] %v1632
        %1721 = vst [vmem:[%s724 + $0x2a8] sm:$0xff] %v1633
        %1722 = vst [vmem:[%s724 + $0x2b0] sm:$0xff] %v1634
        %1723 = vst [vmem:[%s724 + $0x2b8] sm:$0xff] %v1635
        %s1724 = sand.u32 %s310, 1
        %s1725 = scalar_lea.sflag [#allocation4], %s1724
        %s1726 = sand.u32 %s310, 1
        %s1727 = smul.addr %s1726, 704
        %s1728 = scalar_lea.vmem [#allocation17], %s1727
        // Predicated region
        $region97: #{tpu_custom_call.1} parent=55 // pred_check
          %p1729 = pneg %p320
        $region98: #{tpu_custom_call.1} parent=55 // pred_check_branch
          %1731 = sbr.rel (%p1729) target = $region100
        $region99: #{tpu_custom_call.1} parent=55 // pred_region
          %s1732 = smul.u32 22, %s42
          %1734 = vsyncadd %s1725, 0
          %s1735 = smul.addr %s1732, 4
          %s1736 = smul.addr %s1735, 8
          %s1737 = scalar_lea.hbm %s9, %s1736
          %s1738 = sshll.u32 %s1728, 4
          %s1739 = int_to_ptr.vmem [resolvable:$true] %s1738
          %s1740 = sshll.u32 %s1737, 4
          %s1741 = int_to_ptr.hbm [resolvable:$true] %s1740
          %1746 = dma.vmem_to_hbm [thread:$0]  %s1739, 11264, %s1741, %s1725, 512, 512, 32
        $region100: #{tpu_custom_call.1} parent=55 // pred_fallthru
          _
      $region56: #{tpu_custom_call.1} parent=5 // pred_fallthru
        _
      %p1747 = scmp.le.s32.totalorder 2, %s33
      // Predicated region
      $region101: #{tpu_custom_call.1} parent=5 // pred_check
        %p1748 = pneg %p1747
      $region102: #{tpu_custom_call.1} parent=5 // pred_check_branch
        %1750 = sbr.rel (%p1748) target = $region104
      $region103: #{tpu_custom_call.1} parent=5 // pred_region
        %s1751 = ssub.s32 %s33, 2
        // Predicated region
        $region105: #{tpu_custom_call.1} parent=103 // pred_check
          %p1752 = pneg %p326
        $region106: #{tpu_custom_call.1} parent=103 // pred_check_branch
          %1754 = sbr.rel (%p1752) target = $region108
        $region107: #{tpu_custom_call.1} parent=103 // pred_region
          %s1755 = sand.u32 %s311, 1
          %s1756 = scalar_lea.sflag [#allocation4], %s1755
          %s1757 = sand.u32 %s311, 1
          %s1758 = smul.addr %s1757, 704
          %s1759 = scalar_lea.vmem [#allocation17], %s1758
          %1761 = dma.done %s1756, 11264
        $region108: #{tpu_custom_call.1} parent=103 // pred_fallthru
          _
      $region104: #{tpu_custom_call.1} parent=5 // pred_fallthru
        _
    $region6: #{tpu_custom_call.1} parent=1 // loop_footer
      %s37 = sadd.s32 1, %s33
    $region7: #{tpu_custom_call.1} parent=1 // loop_footer_branch
      %32 = sbr.rel target = $region3
    $region8: #{tpu_custom_call.1} parent=1 // loop_exit
      _
    %1762 = vsyncpa [#allocation3], 1
    %s1763 = scalar_lea.sflag [#allocation3], 1
    %1764 = vsyncpa %s1763, 1
    %1765 = vsyncpa [#allocation6], 1
    %s1766 = scalar_lea.sflag [#allocation6], 1
    %1767 = vsyncpa %s1766, 1
    %1768 = vsyncpa [#allocation9], 1
    %s1769 = scalar_lea.sflag [#allocation9], 1
    %1770 = vsyncpa %s1769, 1
    %1771 = vsyncpa [#allocation12], 1
    %s1772 = scalar_lea.sflag [#allocation12], 1
    %1773 = vsyncpa %s1772, 1
    %1774 = vsyncpa [#allocation15], 1
    %s1775 = scalar_lea.sflag [#allocation15], 1
    %1776 = vsyncpa %s1775, 1
    %1777 = vsyncpa [#allocation4], 1
    %s1778 = scalar_lea.sflag [#allocation4], 1
    %1779 = vsyncpa %s1778, 1

</llo_original>
